<compile_context>
chip_gen: v6e
topology: v6e:2x2x1
jax: 0.10.0
libtpu: 0.0.40
codegen_flags: <defaults>
</compile_context>

<pallas_src>
import numpy as np
import jax
import jax.numpy as jnp
from jax.experimental import pallas as pl
from jax.experimental.pallas import tpu as pltpu


def _round_up(x, m):
    return ((x + m - 1) // m) * m


# ----------------------------- LSTM kernel ---------------------------------
def _make_lstm_kernel(seq_len: int, batch: int, num_layers: int, hidden_size: int):
    T, B, L, H = seq_len, batch, num_layers, hidden_size

    def lstm_kernel(x_ref, w_ih_ref, w_hh_ref, b_ref, out_ref):
        # x_ref:    (T*B, E)    bf16  (whole padded sequence resident in VMEM)
        # w_ih_ref: (L, E, 4H)  bf16
        # w_hh_ref: (L, H, 4H)  bf16
        # b_ref:    (L, 1, 4H)  f32   (b_ih + b_hh combined)
        # out_ref:  (T*B, H)    bf16  (top-layer hidden per step)

        # ---- prologue: layer-0 input projection hoisted out of the recurrence.
        # One MXU matmul with M = T*B rows instead of M = B per step.
        xproj0 = jnp.dot(x_ref[...], w_ih_ref[0],
                         preferred_element_type=jnp.float32)          # (T*B, 4H) f32

        # Hoist per-layer weights / pre-broadcast biases out of the unrolled time
        # loop (JAX does not CSE broadcast_in_dim).  At H=32 the hoisted weights
        # are a handful of vregs; at H >= 128 index w_*_ref at the use site so
        # Mosaic streams MXU operands from VMEM instead of pinning vregs.
        w_hh = [w_hh_ref[l] for l in range(L)]
        w_ih = [w_ih_ref[l] for l in range(1, L)]
        bias = [jnp.broadcast_to(b_ref[l], (B, 4 * H)) for l in range(L)]

        # h/c carried as plain values (vreg-resident) across the static time loop.
        h = [jnp.zeros((B, H), jnp.float32) for _ in range(L)]
        c = [jnp.zeros((B, H), jnp.float32) for _ in range(L)]

        for t in range(T):                       # static T: fully unrolled,
            for l in range(L):                   # all indices concrete
                if l == 0:
                    gates = xproj0[t * B:(t + 1) * B]          # hoisted projection
                else:
                    gates = jnp.dot(h[l - 1].astype(jnp.bfloat16), w_ih[l - 1],
                                    preferred_element_type=jnp.float32)
                gates = gates + jnp.dot(h[l].astype(jnp.bfloat16), w_hh[l],
                                        preferred_element_type=jnp.float32)
                gates = gates + bias[l]                        # (B, 4H) f32
                # At H=32 the 4H gates are exactly one 128-lane vreg; full-width
                # transcendentals are fine.  For H >= 64 apply sigmoid only to the
                # [i,f,o] 3H slice and tanh only to the g slice.
                sig = jax.nn.sigmoid(gates)
                tng = jnp.tanh(gates)
                i_g = sig[:, 0 * H:1 * H]
                f_g = sig[:, 1 * H:2 * H]
                g_g = tng[:, 2 * H:3 * H]
                o_g = sig[:, 3 * H:4 * H]
                c[l] = f_g * c[l] + i_g * g_g
                h[l] = o_g * jnp.tanh(c[l])
            # TODO(synk): at larger H emit a lane-dense output layout (last dim a
            # multiple of 128) to avoid masked vst.msk; at B=8/H=32 this store is
            # a few hundred bytes per step and irrelevant.
            out_ref[pl.ds(t * B, B), :] = h[L - 1].astype(out_ref.dtype)

    return lstm_kernel


def run_lstm(x_flat, w_ih, w_hh, b, seq_len, batch, hidden_size):
    """x_flat: (T*B, E) bf16 (B already padded to a multiple of 8).
    w_ih: (L, E, 4H) bf16, w_hh: (L, H, 4H) bf16, b: (L, 1, 4H) f32.
    Returns (T*B, H) bf16 (top-layer hidden states, time-major)."""
    T, B, H = seq_len, batch, hidden_size
    L = w_hh.shape[0]
    E = x_flat.shape[1]
    kernel = _make_lstm_kernel(T, B, L, H)

    # Explicit VMEM budget for the whole-sequence-resident design (v5e scoped
    # default is only 16 MiB; v7x physical VMEM is 64 MiB — don't rely on defaults).
    slab_bytes = int(x_flat.size * 2 + w_ih.size * 2 + w_hh.size * 2 +
                     b.size * 4 + T * B * H * 2)
    vmem_limit = int(max(8 << 20, 4 * slab_bytes))

    cost = pl.CostEstimate(
        flops=int(2 * T * B * L * (E + H) * 4 * H),
        transcendentals=int(T * B * L * 8 * H),
        bytes_accessed=slab_bytes,
    )

    # TODO(synk): on v7x add a batch grid axis with dimension_semantics=("parallel",)
    # so the recurrence shards across both TensorCores; at B_pad=8 one core suffices.
    return pl.pallas_call(
        kernel,
        out_shape=jax.ShapeDtypeStruct((T * B, H), jnp.bfloat16),
        compiler_params=pltpu.CompilerParams(vmem_limit_bytes=vmem_limit),
        cost_estimate=cost,
    )(x_flat, w_ih, w_hh, b)


# ----------------------------- Linear kernel --------------------------------
def linear_kernel(x_ref, w_ref, b_ref, o_ref):
    # x is already bf16 (cast once upstream, not per (i, j) tile).
    o_ref[...] = (
        jnp.dot(x_ref[...], w_ref[...], preferred_element_type=jnp.float32)
        + b_ref[...]
    )


def run_linear(x, w, b, *, tn=512, tv=512):
    """x: (N, H) bf16, w: (H, V) bf16, b: (1, V) f32 -> (N, V) f32."""
    N, H = x.shape
    V = w.shape[1]
    # Keep tn a multiple of 8 and tv a multiple of 128 after clamping; pad the
    # arrays to tile multiples instead of shrinking tiles below alignment so the
    # output stores of this memory-bound kernel stay lane-dense and unmasked.
    tn = min(tn, _round_up(N, 8))
    tv = min(tv, _round_up(V, 128))
    n_pad = _round_up(N, tn)
    v_pad = _round_up(V, tv)
    if n_pad > N:
        x = jnp.pad(x, ((0, n_pad - N), (0, 0)))
    if v_pad > V:
        w = jnp.pad(w, ((0, 0), (0, v_pad - V)))
        b = jnp.pad(b, ((0, 0), (0, v_pad - V)))

    cost = pl.CostEstimate(
        flops=int(2 * n_pad * H * v_pad),
        transcendentals=0,
        bytes_accessed=int(x.size * 2 + w.size * 2 + b.size * 4 + n_pad * v_pad * 4),
    )

    # TODO(synk): on v7x consider pipeline_mode=pl.Buffered(3) on the weight/output
    # specs to keep the 3.2 TB/s HBM fed at real vocab sizes.
    out = pl.pallas_call(
        linear_kernel,
        out_shape=jax.ShapeDtypeStruct((n_pad, v_pad), jnp.float32),
        grid=(n_pad // tn, v_pad // tv),
        in_specs=[
            pl.BlockSpec((tn, H), lambda i, j: (i, 0)),
            pl.BlockSpec((H, tv), lambda i, j: (0, j)),
            pl.BlockSpec((1, tv), lambda i, j: (0, j)),
        ],
        out_specs=pl.BlockSpec((tn, tv), lambda i, j: (i, j)),
        compiler_params=pltpu.CompilerParams(
            dimension_semantics=("parallel", "parallel")),
        cost_estimate=cost,
    )(x, w, b)
    return out[:N, :V]


# ----------------------------- Module wrapper -------------------------------
class DecoderRNNPallas:
    def __init__(self, embed_size, hidden_size, vocab_size, num_layers,
                 max_seq_length=20, key=jax.random.PRNGKey(0)):
        assert embed_size == hidden_size, (
            "stacked (L, E, 4H)/(L, H, 4H) weight layout assumes embed_size == hidden_size"
        )
        self.E, self.H, self.V, self.L = embed_size, hidden_size, vocab_size, num_layers
        self.max_seq_length = max_seq_length
        ks = jax.random.split(key, 6)
        s = 0.1
        self.embed_w = s * jax.random.normal(ks[0], (vocab_size, embed_size), jnp.float32)
        # PyTorch LSTM weights stored transposed (contraction dim first), gate order
        # [i,f,g,o]; kept split so the layer-0 input projection can be hoisted.
        self.w_ih = (s * jax.random.normal(
            ks[1], (num_layers, embed_size, 4 * hidden_size), jnp.float32)
        ).astype(jnp.bfloat16)
        self.w_hh = (s * jax.random.normal(
            ks[2], (num_layers, hidden_size, 4 * hidden_size), jnp.float32)
        ).astype(jnp.bfloat16)
        # combined bias b_ih + b_hh (when loading real torch weights, sum them here)
        self.b = s * jax.random.normal(ks[3], (num_layers, 1, 4 * hidden_size), jnp.float32)
        self.lin_w = (s * jax.random.normal(ks[4], (hidden_size, vocab_size), jnp.float32)
                      ).astype(jnp.bfloat16)
        self.lin_b = s * jax.random.normal(ks[5], (1, vocab_size), jnp.float32)

    def forward(self, features, captions, lengths):
        """features: (B, E) f32, captions: (B, T) int32,
        lengths: python list, sorted descending, each <= T+1.
        Returns packed logits of shape (sum(lengths), vocab_size)."""
        B, T = captions.shape
        T_seq = T + 1
        B_pad = max(8, _round_up(B, 8))          # sublane-aligned batch

        # --- glue (plain JAX): embedding lookup + prepend features -----------
        emb = jnp.take(self.embed_w, captions, axis=0)                  # (B, T, E)
        seq = jnp.concatenate([features[:, None, :], emb], axis=1)      # (B, T+1, E)
        x_tbe = jnp.transpose(seq, (1, 0, 2))                           # (T+1, B, E)
        if B_pad > B:
            x_tbe = jnp.pad(x_tbe, ((0, 0), (0, B_pad - B), (0, 0)))
        x_flat = x_tbe.reshape(T_seq * B_pad, self.E).astype(jnp.bfloat16)  # cast ONCE

        # --- hot path: multi-layer LSTM over the full padded sequence --------
        h_flat = run_lstm(x_flat, self.w_ih, self.w_hh, self.b,
                          T_seq, B_pad, self.H)                         # (T_seq*B_pad, H) bf16

        # --- hot path: linear on the full padded slab (static shape) ---------
        logits_full = run_linear(h_flat, self.lin_w, self.lin_b)        # (T_seq*B_pad, V) f32

        # --- glue: emulate pack_padded_sequence ordering (gather AFTER linear)
        lengths_np = np.asarray(lengths)
        assert np.all(lengths_np[:-1] >= lengths_np[1:]), "lengths must be sorted descending"
        flat_idx = []
        for t in range(int(lengths_np.max())):
            for bb in range(B):
                if lengths_np[bb] > t:
                    flat_idx.append(t * B_pad + bb)
        flat_idx = jnp.asarray(flat_idx, jnp.int32)
        return logits_full[flat_idx]                                    # (sum(lengths), V)


# --------------------------------- main --------------------------------------
if __name__ == "__main__":
    embed_size = 32
    hidden_size = 32
    vocab_size = 64
    num_layers = 2
    B, T = 4, 7                      # captions (B, T); sequence fed to LSTM is T+1 = 8

    model = DecoderRNNPallas(embed_size, hidden_size, vocab_size, num_layers,
                             key=jax.random.PRNGKey(0))

    key = jax.random.PRNGKey(0)
    kf, kc = jax.random.split(key)
    features = jax.random.normal(kf, (B, embed_size), jnp.float32)
    captions = jax.random.randint(kc, (B, T), 0, vocab_size, jnp.int32)
    lengths = [8, 6, 5, 3]           # sorted descending, each <= T+1

    out = model.forward(features, captions, lengths)
    out = jax.block_until_ready(out)
    assert out.shape == (sum(lengths), vocab_size)
    assert bool(jnp.all(jnp.isfinite(out)))
    print("KERNEL_OK")
</pallas_src>

<mosaic_0001>
module attributes {stable_mosaic.version = 11 : i64} {
  func.func @lstm_kernel(%arg0: memref<64x32xbf16, #tpu.memory_space<vmem>>, %arg1: memref<2x32x128xbf16, #tpu.memory_space<vmem>>, %arg2: memref<2x32x128xbf16, #tpu.memory_space<vmem>>, %arg3: memref<2x1x128xf32, #tpu.memory_space<vmem>>, %arg4: memref<64x32xbf16, #tpu.memory_space<vmem>>) attributes {dimension_semantics = [], scalar_prefetch = 0 : i64, scratch_operands = 0 : i64, tpu.core_type = #tpu.core_type<tc>} {
    %c0 = arith.constant 0 : index
    %c0_0 = arith.constant 0 : index
    %0 = vector.load %arg0[%c0, %c0_0] : memref<64x32xbf16, #tpu.memory_space<vmem>>, vector<64x32xbf16>
    %c0_1 = arith.constant 0 : index
    %c0_2 = arith.constant 0 : index
    %c0_3 = arith.constant 0 : index
    %1 = vector.load %arg1[%c0_1, %c0_2, %c0_3] : memref<2x32x128xbf16, #tpu.memory_space<vmem>>, vector<1x32x128xbf16>
    %2 = vector.shape_cast %1 : vector<1x32x128xbf16> to vector<32x128xbf16>
    %cst = arith.constant dense<0.000000e+00> : vector<64x128xf32>
    %3 = tpu.matmul %0, %2, %cst {dimension_numbers = #tpu.dot_dimension_numbers<[1], [0], [0], [1], [0, 0, 1, 1], [], []>} : vector<64x32xbf16>, vector<32x128xbf16>, vector<64x128xf32> -> vector<64x128xf32>
    %c0_4 = arith.constant 0 : index
    %c0_5 = arith.constant 0 : index
    %c0_6 = arith.constant 0 : index
    %4 = vector.load %arg2[%c0_4, %c0_5, %c0_6] : memref<2x32x128xbf16, #tpu.memory_space<vmem>>, vector<1x32x128xbf16>
    %5 = vector.shape_cast %4 : vector<1x32x128xbf16> to vector<32x128xbf16>
    %c1 = arith.constant 1 : index
    %c0_7 = arith.constant 0 : index
    %c0_8 = arith.constant 0 : index
    %6 = vector.load %arg2[%c1, %c0_7, %c0_8] : memref<2x32x128xbf16, #tpu.memory_space<vmem>>, vector<1x32x128xbf16>
    %7 = vector.shape_cast %6 : vector<1x32x128xbf16> to vector<32x128xbf16>
    %c1_9 = arith.constant 1 : index
    %c0_10 = arith.constant 0 : index
    %c0_11 = arith.constant 0 : index
    %8 = vector.load %arg1[%c1_9, %c0_10, %c0_11] : memref<2x32x128xbf16, #tpu.memory_space<vmem>>, vector<1x32x128xbf16>
    %9 = vector.shape_cast %8 : vector<1x32x128xbf16> to vector<32x128xbf16>
    %c0_12 = arith.constant 0 : index
    %c0_13 = arith.constant 0 : index
    %c0_14 = arith.constant 0 : index
    %10 = vector.load %arg3[%c0_12, %c0_13, %c0_14] : memref<2x1x128xf32, #tpu.memory_space<vmem>>, vector<1x1x128xf32>
    %11 = vector.shape_cast %10 : vector<1x1x128xf32> to vector<1x128xf32>
    %12 = vector.shape_cast %11 : vector<1x128xf32> to vector<1x128xf32>
    %13 = vector.broadcast %12 : vector<1x128xf32> to vector<8x128xf32>
    %c1_15 = arith.constant 1 : index
    %c0_16 = arith.constant 0 : index
    %c0_17 = arith.constant 0 : index
    %14 = vector.load %arg3[%c1_15, %c0_16, %c0_17] : memref<2x1x128xf32, #tpu.memory_space<vmem>>, vector<1x1x128xf32>
    %15 = vector.shape_cast %14 : vector<1x1x128xf32> to vector<1x128xf32>
    %16 = vector.shape_cast %15 : vector<1x128xf32> to vector<1x128xf32>
    %17 = vector.broadcast %16 : vector<1x128xf32> to vector<8x128xf32>
    %cst_18 = arith.constant 0.000000e+00 : f32
    %18 = vector.broadcast %cst_18 : f32 to vector<8x32xf32>
    %cst_19 = arith.constant 0.000000e+00 : f32
    %19 = vector.broadcast %cst_19 : f32 to vector<8x32xf32>
    %cst_20 = arith.constant 0.000000e+00 : f32
    %20 = vector.broadcast %cst_20 : f32 to vector<8x32xf32>
    %cst_21 = arith.constant 0.000000e+00 : f32
    %21 = vector.broadcast %cst_21 : f32 to vector<8x32xf32>
    %22 = vector.extract_strided_slice %3 {offsets = [0, 0], sizes = [8, 128], strides = [1, 1]} : vector<64x128xf32> to vector<8x128xf32>
    %23 = arith.truncf %18 : vector<8x32xf32> to vector<8x32xbf16>
    %cst_22 = arith.constant dense<0.000000e+00> : vector<8x128xf32>
    %24 = tpu.matmul %23, %5, %cst_22 {dimension_numbers = #tpu.dot_dimension_numbers<[1], [0], [0], [1], [0, 0, 1, 1], [], []>} : vector<8x32xbf16>, vector<32x128xbf16>, vector<8x128xf32> -> vector<8x128xf32>
    %25 = arith.addf %22, %24 : vector<8x128xf32>
    %26 = arith.addf %25, %13 : vector<8x128xf32>
    %27 = arith.negf %26 : vector<8x128xf32>
    %28 = math.exp %27 : vector<8x128xf32>
    %cst_23 = arith.constant 1.000000e+00 : f32
    %29 = vector.broadcast %cst_23 : f32 to vector<8x128xf32>
    %30 = arith.addf %29, %28 : vector<8x128xf32>
    %31 = arith.divf %29, %30 : vector<8x128xf32>
    %32 = math.tanh %26 : vector<8x128xf32>
    %33 = vector.extract_strided_slice %31 {offsets = [0, 0], sizes = [8, 32], strides = [1, 1]} : vector<8x128xf32> to vector<8x32xf32>
    %34 = vector.extract_strided_slice %31 {offsets = [0, 32], sizes = [8, 32], strides = [1, 1]} : vector<8x128xf32> to vector<8x32xf32>
    %35 = vector.extract_strided_slice %32 {offsets = [0, 64], sizes = [8, 32], strides = [1, 1]} : vector<8x128xf32> to vector<8x32xf32>
    %36 = vector.extract_strided_slice %31 {offsets = [0, 96], sizes = [8, 32], strides = [1, 1]} : vector<8x128xf32> to vector<8x32xf32>
    %37 = arith.mulf %34, %20 : vector<8x32xf32>
    %38 = arith.mulf %33, %35 : vector<8x32xf32>
    %39 = arith.addf %37, %38 : vector<8x32xf32>
    %40 = math.tanh %39 : vector<8x32xf32>
    %41 = arith.mulf %36, %40 : vector<8x32xf32>
    %42 = arith.truncf %41 : vector<8x32xf32> to vector<8x32xbf16>
    %cst_24 = arith.constant dense<0.000000e+00> : vector<8x128xf32>
    %43 = tpu.matmul %42, %9, %cst_24 {dimension_numbers = #tpu.dot_dimension_numbers<[1], [0], [0], [1], [0, 0, 1, 1], [], []>} : vector<8x32xbf16>, vector<32x128xbf16>, vector<8x128xf32> -> vector<8x128xf32>
    %44 = arith.truncf %19 : vector<8x32xf32> to vector<8x32xbf16>
    %cst_25 = arith.constant dense<0.000000e+00> : vector<8x128xf32>
    %45 = tpu.matmul %44, %7, %cst_25 {dimension_numbers = #tpu.dot_dimension_numbers<[1], [0], [0], [1], [0, 0, 1, 1], [], []>} : vector<8x32xbf16>, vector<32x128xbf16>, vector<8x128xf32> -> vector<8x128xf32>
    %46 = arith.addf %43, %45 : vector<8x128xf32>
    %47 = arith.addf %46, %17 : vector<8x128xf32>
    %48 = arith.negf %47 : vector<8x128xf32>
    %49 = math.exp %48 : vector<8x128xf32>
    %cst_26 = arith.constant 1.000000e+00 : f32
    %50 = vector.broadcast %cst_26 : f32 to vector<8x128xf32>
    %51 = arith.addf %50, %49 : vector<8x128xf32>
    %52 = arith.divf %50, %51 : vector<8x128xf32>
    %53 = math.tanh %47 : vector<8x128xf32>
    %54 = vector.extract_strided_slice %52 {offsets = [0, 0], sizes = [8, 32], strides = [1, 1]} : vector<8x128xf32> to vector<8x32xf32>
    %55 = vector.extract_strided_slice %52 {offsets = [0, 32], sizes = [8, 32], strides = [1, 1]} : vector<8x128xf32> to vector<8x32xf32>
    %56 = vector.extract_strided_slice %53 {offsets = [0, 64], sizes = [8, 32], strides = [1, 1]} : vector<8x128xf32> to vector<8x32xf32>
    %57 = vector.extract_strided_slice %52 {offsets = [0, 96], sizes = [8, 32], strides = [1, 1]} : vector<8x128xf32> to vector<8x32xf32>
    %58 = arith.mulf %55, %21 : vector<8x32xf32>
    %59 = arith.mulf %54, %56 : vector<8x32xf32>
    %60 = arith.addf %58, %59 : vector<8x32xf32>
    %61 = math.tanh %60 : vector<8x32xf32>
    %62 = arith.mulf %57, %61 : vector<8x32xf32>
    %63 = arith.truncf %62 : vector<8x32xf32> to vector<8x32xbf16>
    %c0_27 = arith.constant 0 : index
    %c0_28 = arith.constant 0 : index
    %64 = vector.load %arg4[%c0_27, %c0_28] : memref<64x32xbf16, #tpu.memory_space<vmem>>, vector<8x32xbf16>
    tpu.vector_store %arg4[%c0_27, %c0_28], %63 {strides = array<i32>} : memref<64x32xbf16, #tpu.memory_space<vmem>>, vector<8x32xbf16>,
    %65 = vector.extract_strided_slice %3 {offsets = [8, 0], sizes = [8, 128], strides = [1, 1]} : vector<64x128xf32> to vector<8x128xf32>
    %66 = arith.truncf %41 : vector<8x32xf32> to vector<8x32xbf16>
    %cst_29 = arith.constant dense<0.000000e+00> : vector<8x128xf32>
    %67 = tpu.matmul %66, %5, %cst_29 {dimension_numbers = #tpu.dot_dimension_numbers<[1], [0], [0], [1], [0, 0, 1, 1], [], []>} : vector<8x32xbf16>, vector<32x128xbf16>, vector<8x128xf32> -> vector<8x128xf32>
    %68 = arith.addf %65, %67 : vector<8x128xf32>
    %69 = arith.addf %68, %13 : vector<8x128xf32>
    %70 = arith.negf %69 : vector<8x128xf32>
    %71 = math.exp %70 : vector<8x128xf32>
    %cst_30 = arith.constant 1.000000e+00 : f32
    %72 = vector.broadcast %cst_30 : f32 to vector<8x128xf32>
    %73 = arith.addf %72, %71 : vector<8x128xf32>
    %74 = arith.divf %72, %73 : vector<8x128xf32>
    %75 = math.tanh %69 : vector<8x128xf32>
    %76 = vector.extract_strided_slice %74 {offsets = [0, 0], sizes = [8, 32], strides = [1, 1]} : vector<8x128xf32> to vector<8x32xf32>
    %77 = vector.extract_strided_slice %74 {offsets = [0, 32], sizes = [8, 32], strides = [1, 1]} : vector<8x128xf32> to vector<8x32xf32>
    %78 = vector.extract_strided_slice %75 {offsets = [0, 64], sizes = [8, 32], strides = [1, 1]} : vector<8x128xf32> to vector<8x32xf32>
    %79 = vector.extract_strided_slice %74 {offsets = [0, 96], sizes = [8, 32], strides = [1, 1]} : vector<8x128xf32> to vector<8x32xf32>
    %80 = arith.mulf %77, %39 : vector<8x32xf32>
    %81 = arith.mulf %76, %78 : vector<8x32xf32>
    %82 = arith.addf %80, %81 : vector<8x32xf32>
    %83 = math.tanh %82 : vector<8x32xf32>
    %84 = arith.mulf %79, %83 : vector<8x32xf32>
    %85 = arith.truncf %84 : vector<8x32xf32> to vector<8x32xbf16>
    %cst_31 = arith.constant dense<0.000000e+00> : vector<8x128xf32>
    %86 = tpu.matmul %85, %9, %cst_31 {dimension_numbers = #tpu.dot_dimension_numbers<[1], [0], [0], [1], [0, 0, 1, 1], [], []>} : vector<8x32xbf16>, vector<32x128xbf16>, vector<8x128xf32> -> vector<8x128xf32>
    %87 = arith.truncf %62 : vector<8x32xf32> to vector<8x32xbf16>
    %cst_32 = arith.constant dense<0.000000e+00> : vector<8x128xf32>
    %88 = tpu.matmul %87, %7, %cst_32 {dimension_numbers = #tpu.dot_dimension_numbers<[1], [0], [0], [1], [0, 0, 1, 1], [], []>} : vector<8x32xbf16>, vector<32x128xbf16>, vector<8x128xf32> -> vector<8x128xf32>
    %89 = arith.addf %86, %88 : vector<8x128xf32>
    %90 = arith.addf %89, %17 : vector<8x128xf32>
    %91 = arith.negf %90 : vector<8x128xf32>
    %92 = math.exp %91 : vector<8x128xf32>
    %cst_33 = arith.constant 1.000000e+00 : f32
    %93 = vector.broadcast %cst_33 : f32 to vector<8x128xf32>
    %94 = arith.addf %93, %92 : vector<8x128xf32>
    %95 = arith.divf %93, %94 : vector<8x128xf32>
    %96 = math.tanh %90 : vector<8x128xf32>
    %97 = vector.extract_strided_slice %95 {offsets = [0, 0], sizes = [8, 32], strides = [1, 1]} : vector<8x128xf32> to vector<8x32xf32>
    %98 = vector.extract_strided_slice %95 {offsets = [0, 32], sizes = [8, 32], strides = [1, 1]} : vector<8x128xf32> to vector<8x32xf32>
    %99 = vector.extract_strided_slice %96 {offsets = [0, 64], sizes = [8, 32], strides = [1, 1]} : vector<8x128xf32> to vector<8x32xf32>
    %100 = vector.extract_strided_slice %95 {offsets = [0, 96], sizes = [8, 32], strides = [1, 1]} : vector<8x128xf32> to vector<8x32xf32>
    %101 = arith.mulf %98, %60 : vector<8x32xf32>
    %102 = arith.mulf %97, %99 : vector<8x32xf32>
    %103 = arith.addf %101, %102 : vector<8x32xf32>
    %104 = math.tanh %103 : vector<8x32xf32>
    %105 = arith.mulf %100, %104 : vector<8x32xf32>
    %106 = arith.truncf %105 : vector<8x32xf32> to vector<8x32xbf16>
    %c8 = arith.constant 8 : index
    %c0_34 = arith.constant 0 : index
    %107 = vector.load %arg4[%c8, %c0_34] : memref<64x32xbf16, #tpu.memory_space<vmem>>, vector<8x32xbf16>
    tpu.vector_store %arg4[%c8, %c0_34], %106 {strides = array<i32>} : memref<64x32xbf16, #tpu.memory_space<vmem>>, vector<8x32xbf16>,
    %108 = vector.extract_strided_slice %3 {offsets = [16, 0], sizes = [8, 128], strides = [1, 1]} : vector<64x128xf32> to vector<8x128xf32>
    %109 = arith.truncf %84 : vector<8x32xf32> to vector<8x32xbf16>
    %cst_35 = arith.constant dense<0.000000e+00> : vector<8x128xf32>
    %110 = tpu.matmul %109, %5, %cst_35 {dimension_numbers = #tpu.dot_dimension_numbers<[1], [0], [0], [1], [0, 0, 1, 1], [], []>} : vector<8x32xbf16>, vector<32x128xbf16>, vector<8x128xf32> -> vector<8x128xf32>
    %111 = arith.addf %108, %110 : vector<8x128xf32>
    %112 = arith.addf %111, %13 : vector<8x128xf32>
    %113 = arith.negf %112 : vector<8x128xf32>
    %114 = math.exp %113 : vector<8x128xf32>
    %cst_36 = arith.constant 1.000000e+00 : f32
    %115 = vector.broadcast %cst_36 : f32 to vector<8x128xf32>
    %116 = arith.addf %115, %114 : vector<8x128xf32>
    %117 = arith.divf %115, %116 : vector<8x128xf32>
    %118 = math.tanh %112 : vector<8x128xf32>
    %119 = vector.extract_strided_slice %117 {offsets = [0, 0], sizes = [8, 32], strides = [1, 1]} : vector<8x128xf32> to vector<8x32xf32>
    %120 = vector.extract_strided_slice %117 {offsets = [0, 32], sizes = [8, 32], strides = [1, 1]} : vector<8x128xf32> to vector<8x32xf32>
    %121 = vector.extract_strided_slice %118 {offsets = [0, 64], sizes = [8, 32], strides = [1, 1]} : vector<8x128xf32> to vector<8x32xf32>
    %122 = vector.extract_strided_slice %117 {offsets = [0, 96], sizes = [8, 32], strides = [1, 1]} : vector<8x128xf32> to vector<8x32xf32>
    %123 = arith.mulf %120, %82 : vector<8x32xf32>
    %124 = arith.mulf %119, %121 : vector<8x32xf32>
    %125 = arith.addf %123, %124 : vector<8x32xf32>
    %126 = math.tanh %125 : vector<8x32xf32>
    %127 = arith.mulf %122, %126 : vector<8x32xf32>
    %128 = arith.truncf %127 : vector<8x32xf32> to vector<8x32xbf16>
    %cst_37 = arith.constant dense<0.000000e+00> : vector<8x128xf32>
    %129 = tpu.matmul %128, %9, %cst_37 {dimension_numbers = #tpu.dot_dimension_numbers<[1], [0], [0], [1], [0, 0, 1, 1], [], []>} : vector<8x32xbf16>, vector<32x128xbf16>, vector<8x128xf32> -> vector<8x128xf32>
    %130 = arith.truncf %105 : vector<8x32xf32> to vector<8x32xbf16>
    %cst_38 = arith.constant dense<0.000000e+00> : vector<8x128xf32>
    %131 = tpu.matmul %130, %7, %cst_38 {dimension_numbers = #tpu.dot_dimension_numbers<[1], [0], [0], [1], [0, 0, 1, 1], [], []>} : vector<8x32xbf16>, vector<32x128xbf16>, vector<8x128xf32> -> vector<8x128xf32>
    %132 = arith.addf %129, %131 : vector<8x128xf32>
    %133 = arith.addf %132, %17 : vector<8x128xf32>
    %134 = arith.negf %133 : vector<8x128xf32>
    %135 = math.exp %134 : vector<8x128xf32>
    %cst_39 = arith.constant 1.000000e+00 : f32
    %136 = vector.broadcast %cst_39 : f32 to vector<8x128xf32>
    %137 = arith.addf %136, %135 : vector<8x128xf32>
    %138 = arith.divf %136, %137 : vector<8x128xf32>
    %139 = math.tanh %133 : vector<8x128xf32>
    %140 = vector.extract_strided_slice %138 {offsets = [0, 0], sizes = [8, 32], strides = [1, 1]} : vector<8x128xf32> to vector<8x32xf32>
    %141 = vector.extract_strided_slice %138 {offsets = [0, 32], sizes = [8, 32], strides = [1, 1]} : vector<8x128xf32> to vector<8x32xf32>
    %142 = vector.extract_strided_slice %139 {offsets = [0, 64], sizes = [8, 32], strides = [1, 1]} : vector<8x128xf32> to vector<8x32xf32>
    %143 = vector.extract_strided_slice %138 {offsets = [0, 96], sizes = [8, 32], strides = [1, 1]} : vector<8x128xf32> to vector<8x32xf32>
    %144 = arith.mulf %141, %103 : vector<8x32xf32>
    %145 = arith.mulf %140, %142 : vector<8x32xf32>
    %146 = arith.addf %144, %145 : vector<8x32xf32>
    %147 = math.tanh %146 : vector<8x32xf32>
    %148 = arith.mulf %143, %147 : vector<8x32xf32>
    %149 = arith.truncf %148 : vector<8x32xf32> to vector<8x32xbf16>
    %c16 = arith.constant 16 : index
    %c0_40 = arith.constant 0 : index
    %150 = vector.load %arg4[%c16, %c0_40] : memref<64x32xbf16, #tpu.memory_space<vmem>>, vector<8x32xbf16>
    tpu.vector_store %arg4[%c16, %c0_40], %149 {strides = array<i32>} : memref<64x32xbf16, #tpu.memory_space<vmem>>, vector<8x32xbf16>,
    %151 = vector.extract_strided_slice %3 {offsets = [24, 0], sizes = [8, 128], strides = [1, 1]} : vector<64x128xf32> to vector<8x128xf32>
    %152 = arith.truncf %127 : vector<8x32xf32> to vector<8x32xbf16>
    %cst_41 = arith.constant dense<0.000000e+00> : vector<8x128xf32>
    %153 = tpu.matmul %152, %5, %cst_41 {dimension_numbers = #tpu.dot_dimension_numbers<[1], [0], [0], [1], [0, 0, 1, 1], [], []>} : vector<8x32xbf16>, vector<32x128xbf16>, vector<8x128xf32> -> vector<8x128xf32>
    %154 = arith.addf %151, %153 : vector<8x128xf32>
    %155 = arith.addf %154, %13 : vector<8x128xf32>
    %156 = arith.negf %155 : vector<8x128xf32>
    %157 = math.exp %156 : vector<8x128xf32>
    %cst_42 = arith.constant 1.000000e+00 : f32
    %158 = vector.broadcast %cst_42 : f32 to vector<8x128xf32>
    %159 = arith.addf %158, %157 : vector<8x128xf32>
    %160 = arith.divf %158, %159 : vector<8x128xf32>
    %161 = math.tanh %155 : vector<8x128xf32>
    %162 = vector.extract_strided_slice %160 {offsets = [0, 0], sizes = [8, 32], strides = [1, 1]} : vector<8x128xf32> to vector<8x32xf32>
    %163 = vector.extract_strided_slice %160 {offsets = [0, 32], sizes = [8, 32], strides = [1, 1]} : vector<8x128xf32> to vector<8x32xf32>
    %164 = vector.extract_strided_slice %161 {offsets = [0, 64], sizes = [8, 32], strides = [1, 1]} : vector<8x128xf32> to vector<8x32xf32>
    %165 = vector.extract_strided_slice %160 {offsets = [0, 96], sizes = [8, 32], strides = [1, 1]} : vector<8x128xf32> to vector<8x32xf32>
    %166 = arith.mulf %163, %125 : vector<8x32xf32>
    %167 = arith.mulf %162, %164 : vector<8x32xf32>
    %168 = arith.addf %166, %167 : vector<8x32xf32>
    %169 = math.tanh %168 : vector<8x32xf32>
    %170 = arith.mulf %165, %169 : vector<8x32xf32>
    %171 = arith.truncf %170 : vector<8x32xf32> to vector<8x32xbf16>
    %cst_43 = arith.constant dense<0.000000e+00> : vector<8x128xf32>
    %172 = tpu.matmul %171, %9, %cst_43 {dimension_numbers = #tpu.dot_dimension_numbers<[1], [0], [0], [1], [0, 0, 1, 1], [], []>} : vector<8x32xbf16>, vector<32x128xbf16>, vector<8x128xf32> -> vector<8x128xf32>
    %173 = arith.truncf %148 : vector<8x32xf32> to vector<8x32xbf16>
    %cst_44 = arith.constant dense<0.000000e+00> : vector<8x128xf32>
    %174 = tpu.matmul %173, %7, %cst_44 {dimension_numbers = #tpu.dot_dimension_numbers<[1], [0], [0], [1], [0, 0, 1, 1], [], []>} : vector<8x32xbf16>, vector<32x128xbf16>, vector<8x128xf32> -> vector<8x128xf32>
    %175 = arith.addf %172, %174 : vector<8x128xf32>
    %176 = arith.addf %175, %17 : vector<8x128xf32>
    %177 = arith.negf %176 : vector<8x128xf32>
    %178 = math.exp %177 : vector<8x128xf32>
    %cst_45 = arith.constant 1.000000e+00 : f32
    %179 = vector.broadcast %cst_45 : f32 to vector<8x128xf32>
    %180 = arith.addf %179, %178 : vector<8x128xf32>
    %181 = arith.divf %179, %180 : vector<8x128xf32>
    %182 = math.tanh %176 : vector<8x128xf32>
    %183 = vector.extract_strided_slice %181 {offsets = [0, 0], sizes = [8, 32], strides = [1, 1]} : vector<8x128xf32> to vector<8x32xf32>
    %184 = vector.extract_strided_slice %181 {offsets = [0, 32], sizes = [8, 32], strides = [1, 1]} : vector<8x128xf32> to vector<8x32xf32>
    %185 = vector.extract_strided_slice %182 {offsets = [0, 64], sizes = [8, 32], strides = [1, 1]} : vector<8x128xf32> to vector<8x32xf32>
    %186 = vector.extract_strided_slice %181 {offsets = [0, 96], sizes = [8, 32], strides = [1, 1]} : vector<8x128xf32> to vector<8x32xf32>
    %187 = arith.mulf %184, %146 : vector<8x32xf32>
    %188 = arith.mulf %183, %185 : vector<8x32xf32>
    %189 = arith.addf %187, %188 : vector<8x32xf32>
    %190 = math.tanh %189 : vector<8x32xf32>
    %191 = arith.mulf %186, %190 : vector<8x32xf32>
    %192 = arith.truncf %191 : vector<8x32xf32> to vector<8x32xbf16>
    %c24 = arith.constant 24 : index
    %c0_46 = arith.constant 0 : index
    %193 = vector.load %arg4[%c24, %c0_46] : memref<64x32xbf16, #tpu.memory_space<vmem>>, vector<8x32xbf16>
    tpu.vector_store %arg4[%c24, %c0_46], %192 {strides = array<i32>} : memref<64x32xbf16, #tpu.memory_space<vmem>>, vector<8x32xbf16>,
    %194 = vector.extract_strided_slice %3 {offsets = [32, 0], sizes = [8, 128], strides = [1, 1]} : vector<64x128xf32> to vector<8x128xf32>
    %195 = arith.truncf %170 : vector<8x32xf32> to vector<8x32xbf16>
    %cst_47 = arith.constant dense<0.000000e+00> : vector<8x128xf32>
    %196 = tpu.matmul %195, %5, %cst_47 {dimension_numbers = #tpu.dot_dimension_numbers<[1], [0], [0], [1], [0, 0, 1, 1], [], []>} : vector<8x32xbf16>, vector<32x128xbf16>, vector<8x128xf32> -> vector<8x128xf32>
    %197 = arith.addf %194, %196 : vector<8x128xf32>
    %198 = arith.addf %197, %13 : vector<8x128xf32>
    %199 = arith.negf %198 : vector<8x128xf32>
    %200 = math.exp %199 : vector<8x128xf32>
    %cst_48 = arith.constant 1.000000e+00 : f32
    %201 = vector.broadcast %cst_48 : f32 to vector<8x128xf32>
    %202 = arith.addf %201, %200 : vector<8x128xf32>
    %203 = arith.divf %201, %202 : vector<8x128xf32>
    %204 = math.tanh %198 : vector<8x128xf32>
    %205 = vector.extract_strided_slice %203 {offsets = [0, 0], sizes = [8, 32], strides = [1, 1]} : vector<8x128xf32> to vector<8x32xf32>
    %206 = vector.extract_strided_slice %203 {offsets = [0, 32], sizes = [8, 32], strides = [1, 1]} : vector<8x128xf32> to vector<8x32xf32>
    %207 = vector.extract_strided_slice %204 {offsets = [0, 64], sizes = [8, 32], strides = [1, 1]} : vector<8x128xf32> to vector<8x32xf32>
    %208 = vector.extract_strided_slice %203 {offsets = [0, 96], sizes = [8, 32], strides = [1, 1]} : vector<8x128xf32> to vector<8x32xf32>
    %209 = arith.mulf %206, %168 : vector<8x32xf32>
    %210 = arith.mulf %205, %207 : vector<8x32xf32>
    %211 = arith.addf %209, %210 : vector<8x32xf32>
    %212 = math.tanh %211 : vector<8x32xf32>
    %213 = arith.mulf %208, %212 : vector<8x32xf32>
    %214 = arith.truncf %213 : vector<8x32xf32> to vector<8x32xbf16>
    %cst_49 = arith.constant dense<0.000000e+00> : vector<8x128xf32>
    %215 = tpu.matmul %214, %9, %cst_49 {dimension_numbers = #tpu.dot_dimension_numbers<[1], [0], [0], [1], [0, 0, 1, 1], [], []>} : vector<8x32xbf16>, vector<32x128xbf16>, vector<8x128xf32> -> vector<8x128xf32>
    %216 = arith.truncf %191 : vector<8x32xf32> to vector<8x32xbf16>
    %cst_50 = arith.constant dense<0.000000e+00> : vector<8x128xf32>
    %217 = tpu.matmul %216, %7, %cst_50 {dimension_numbers = #tpu.dot_dimension_numbers<[1], [0], [0], [1], [0, 0, 1, 1], [], []>} : vector<8x32xbf16>, vector<32x128xbf16>, vector<8x128xf32> -> vector<8x128xf32>
    %218 = arith.addf %215, %217 : vector<8x128xf32>
    %219 = arith.addf %218, %17 : vector<8x128xf32>
    %220 = arith.negf %219 : vector<8x128xf32>
    %221 = math.exp %220 : vector<8x128xf32>
    %cst_51 = arith.constant 1.000000e+00 : f32
    %222 = vector.broadcast %cst_51 : f32 to vector<8x128xf32>
    %223 = arith.addf %222, %221 : vector<8x128xf32>
    %224 = arith.divf %222, %223 : vector<8x128xf32>
    %225 = math.tanh %219 : vector<8x128xf32>
    %226 = vector.extract_strided_slice %224 {offsets = [0, 0], sizes = [8, 32], strides = [1, 1]} : vector<8x128xf32> to vector<8x32xf32>
    %227 = vector.extract_strided_slice %224 {offsets = [0, 32], sizes = [8, 32], strides = [1, 1]} : vector<8x128xf32> to vector<8x32xf32>
    %228 = vector.extract_strided_slice %225 {offsets = [0, 64], sizes = [8, 32], strides = [1, 1]} : vector<8x128xf32> to vector<8x32xf32>
    %229 = vector.extract_strided_slice %224 {offsets = [0, 96], sizes = [8, 32], strides = [1, 1]} : vector<8x128xf32> to vector<8x32xf32>
    %230 = arith.mulf %227, %189 : vector<8x32xf32>
    %231 = arith.mulf %226, %228 : vector<8x32xf32>
    %232 = arith.addf %230, %231 : vector<8x32xf32>
    %233 = math.tanh %232 : vector<8x32xf32>
    %234 = arith.mulf %229, %233 : vector<8x32xf32>
    %235 = arith.truncf %234 : vector<8x32xf32> to vector<8x32xbf16>
    %c32 = arith.constant 32 : index
    %c0_52 = arith.constant 0 : index
    %236 = vector.load %arg4[%c32, %c0_52] : memref<64x32xbf16, #tpu.memory_space<vmem>>, vector<8x32xbf16>
    tpu.vector_store %arg4[%c32, %c0_52], %235 {strides = array<i32>} : memref<64x32xbf16, #tpu.memory_space<vmem>>, vector<8x32xbf16>,
    %237 = vector.extract_strided_slice %3 {offsets = [40, 0], sizes = [8, 128], strides = [1, 1]} : vector<64x128xf32> to vector<8x128xf32>
    %238 = arith.truncf %213 : vector<8x32xf32> to vector<8x32xbf16>
    %cst_53 = arith.constant dense<0.000000e+00> : vector<8x128xf32>
    %239 = tpu.matmul %238, %5, %cst_53 {dimension_numbers = #tpu.dot_dimension_numbers<[1], [0], [0], [1], [0, 0, 1, 1], [], []>} : vector<8x32xbf16>, vector<32x128xbf16>, vector<8x128xf32> -> vector<8x128xf32>
    %240 = arith.addf %237, %239 : vector<8x128xf32>
    %241 = arith.addf %240, %13 : vector<8x128xf32>
    %242 = arith.negf %241 : vector<8x128xf32>
    %243 = math.exp %242 : vector<8x128xf32>
    %cst_54 = arith.constant 1.000000e+00 : f32
    %244 = vector.broadcast %cst_54 : f32 to vector<8x128xf32>
    %245 = arith.addf %244, %243 : vector<8x128xf32>
    %246 = arith.divf %244, %245 : vector<8x128xf32>
    %247 = math.tanh %241 : vector<8x128xf32>
    %248 = vector.extract_strided_slice %246 {offsets = [0, 0], sizes = [8, 32], strides = [1, 1]} : vector<8x128xf32> to vector<8x32xf32>
    %249 = vector.extract_strided_slice %246 {offsets = [0, 32], sizes = [8, 32], strides = [1, 1]} : vector<8x128xf32> to vector<8x32xf32>
    %250 = vector.extract_strided_slice %247 {offsets = [0, 64], sizes = [8, 32], strides = [1, 1]} : vector<8x128xf32> to vector<8x32xf32>
    %251 = vector.extract_strided_slice %246 {offsets = [0, 96], sizes = [8, 32], strides = [1, 1]} : vector<8x128xf32> to vector<8x32xf32>
    %252 = arith.mulf %249, %211 : vector<8x32xf32>
    %253 = arith.mulf %248, %250 : vector<8x32xf32>
    %254 = arith.addf %252, %253 : vector<8x32xf32>
    %255 = math.tanh %254 : vector<8x32xf32>
    %256 = arith.mulf %251, %255 : vector<8x32xf32>
    %257 = arith.truncf %256 : vector<8x32xf32> to vector<8x32xbf16>
    %cst_55 = arith.constant dense<0.000000e+00> : vector<8x128xf32>
    %258 = tpu.matmul %257, %9, %cst_55 {dimension_numbers = #tpu.dot_dimension_numbers<[1], [0], [0], [1], [0, 0, 1, 1], [], []>} : vector<8x32xbf16>, vector<32x128xbf16>, vector<8x128xf32> -> vector<8x128xf32>
    %259 = arith.truncf %234 : vector<8x32xf32> to vector<8x32xbf16>
    %cst_56 = arith.constant dense<0.000000e+00> : vector<8x128xf32>
    %260 = tpu.matmul %259, %7, %cst_56 {dimension_numbers = #tpu.dot_dimension_numbers<[1], [0], [0], [1], [0, 0, 1, 1], [], []>} : vector<8x32xbf16>, vector<32x128xbf16>, vector<8x128xf32> -> vector<8x128xf32>
    %261 = arith.addf %258, %260 : vector<8x128xf32>
    %262 = arith.addf %261, %17 : vector<8x128xf32>
    %263 = arith.negf %262 : vector<8x128xf32>
    %264 = math.exp %263 : vector<8x128xf32>
    %cst_57 = arith.constant 1.000000e+00 : f32
    %265 = vector.broadcast %cst_57 : f32 to vector<8x128xf32>
    %266 = arith.addf %265, %264 : vector<8x128xf32>
    %267 = arith.divf %265, %266 : vector<8x128xf32>
    %268 = math.tanh %262 : vector<8x128xf32>
    %269 = vector.extract_strided_slice %267 {offsets = [0, 0], sizes = [8, 32], strides = [1, 1]} : vector<8x128xf32> to vector<8x32xf32>
    %270 = vector.extract_strided_slice %267 {offsets = [0, 32], sizes = [8, 32], strides = [1, 1]} : vector<8x128xf32> to vector<8x32xf32>
    %271 = vector.extract_strided_slice %268 {offsets = [0, 64], sizes = [8, 32], strides = [1, 1]} : vector<8x128xf32> to vector<8x32xf32>
    %272 = vector.extract_strided_slice %267 {offsets = [0, 96], sizes = [8, 32], strides = [1, 1]} : vector<8x128xf32> to vector<8x32xf32>
    %273 = arith.mulf %270, %232 : vector<8x32xf32>
    %274 = arith.mulf %269, %271 : vector<8x32xf32>
    %275 = arith.addf %273, %274 : vector<8x32xf32>
    %276 = math.tanh %275 : vector<8x32xf32>
    %277 = arith.mulf %272, %276 : vector<8x32xf32>
    %278 = arith.truncf %277 : vector<8x32xf32> to vector<8x32xbf16>
    %c40 = arith.constant 40 : index
    %c0_58 = arith.constant 0 : index
    %279 = vector.load %arg4[%c40, %c0_58] : memref<64x32xbf16, #tpu.memory_space<vmem>>, vector<8x32xbf16>
    tpu.vector_store %arg4[%c40, %c0_58], %278 {strides = array<i32>} : memref<64x32xbf16, #tpu.memory_space<vmem>>, vector<8x32xbf16>,
    %280 = vector.extract_strided_slice %3 {offsets = [48, 0], sizes = [8, 128], strides = [1, 1]} : vector<64x128xf32> to vector<8x128xf32>
    %281 = arith.truncf %256 : vector<8x32xf32> to vector<8x32xbf16>
    %cst_59 = arith.constant dense<0.000000e+00> : vector<8x128xf32>
    %282 = tpu.matmul %281, %5, %cst_59 {dimension_numbers = #tpu.dot_dimension_numbers<[1], [0], [0], [1], [0, 0, 1, 1], [], []>} : vector<8x32xbf16>, vector<32x128xbf16>, vector<8x128xf32> -> vector<8x128xf32>
    %283 = arith.addf %280, %282 : vector<8x128xf32>
    %284 = arith.addf %283, %13 : vector<8x128xf32>
    %285 = arith.negf %284 : vector<8x128xf32>
    %286 = math.exp %285 : vector<8x128xf32>
    %cst_60 = arith.constant 1.000000e+00 : f32
    %287 = vector.broadcast %cst_60 : f32 to vector<8x128xf32>
    %288 = arith.addf %287, %286 : vector<8x128xf32>
    %289 = arith.divf %287, %288 : vector<8x128xf32>
    %290 = math.tanh %284 : vector<8x128xf32>
    %291 = vector.extract_strided_slice %289 {offsets = [0, 0], sizes = [8, 32], strides = [1, 1]} : vector<8x128xf32> to vector<8x32xf32>
    %292 = vector.extract_strided_slice %289 {offsets = [0, 32], sizes = [8, 32], strides = [1, 1]} : vector<8x128xf32> to vector<8x32xf32>
    %293 = vector.extract_strided_slice %290 {offsets = [0, 64], sizes = [8, 32], strides = [1, 1]} : vector<8x128xf32> to vector<8x32xf32>
    %294 = vector.extract_strided_slice %289 {offsets = [0, 96], sizes = [8, 32], strides = [1, 1]} : vector<8x128xf32> to vector<8x32xf32>
    %295 = arith.mulf %292, %254 : vector<8x32xf32>
    %296 = arith.mulf %291, %293 : vector<8x32xf32>
    %297 = arith.addf %295, %296 : vector<8x32xf32>
    %298 = math.tanh %297 : vector<8x32xf32>
    %299 = arith.mulf %294, %298 : vector<8x32xf32>
    %300 = arith.truncf %299 : vector<8x32xf32> to vector<8x32xbf16>
    %cst_61 = arith.constant dense<0.000000e+00> : vector<8x128xf32>
    %301 = tpu.matmul %300, %9, %cst_61 {dimension_numbers = #tpu.dot_dimension_numbers<[1], [0], [0], [1], [0, 0, 1, 1], [], []>} : vector<8x32xbf16>, vector<32x128xbf16>, vector<8x128xf32> -> vector<8x128xf32>
    %302 = arith.truncf %277 : vector<8x32xf32> to vector<8x32xbf16>
    %cst_62 = arith.constant dense<0.000000e+00> : vector<8x128xf32>
    %303 = tpu.matmul %302, %7, %cst_62 {dimension_numbers = #tpu.dot_dimension_numbers<[1], [0], [0], [1], [0, 0, 1, 1], [], []>} : vector<8x32xbf16>, vector<32x128xbf16>, vector<8x128xf32> -> vector<8x128xf32>
    %304 = arith.addf %301, %303 : vector<8x128xf32>
    %305 = arith.addf %304, %17 : vector<8x128xf32>
    %306 = arith.negf %305 : vector<8x128xf32>
    %307 = math.exp %306 : vector<8x128xf32>
    %cst_63 = arith.constant 1.000000e+00 : f32
    %308 = vector.broadcast %cst_63 : f32 to vector<8x128xf32>
    %309 = arith.addf %308, %307 : vector<8x128xf32>
    %310 = arith.divf %308, %309 : vector<8x128xf32>
    %311 = math.tanh %305 : vector<8x128xf32>
    %312 = vector.extract_strided_slice %310 {offsets = [0, 0], sizes = [8, 32], strides = [1, 1]} : vector<8x128xf32> to vector<8x32xf32>
    %313 = vector.extract_strided_slice %310 {offsets = [0, 32], sizes = [8, 32], strides = [1, 1]} : vector<8x128xf32> to vector<8x32xf32>
    %314 = vector.extract_strided_slice %311 {offsets = [0, 64], sizes = [8, 32], strides = [1, 1]} : vector<8x128xf32> to vector<8x32xf32>
    %315 = vector.extract_strided_slice %310 {offsets = [0, 96], sizes = [8, 32], strides = [1, 1]} : vector<8x128xf32> to vector<8x32xf32>
    %316 = arith.mulf %313, %275 : vector<8x32xf32>
    %317 = arith.mulf %312, %314 : vector<8x32xf32>
    %318 = arith.addf %316, %317 : vector<8x32xf32>
    %319 = math.tanh %318 : vector<8x32xf32>
    %320 = arith.mulf %315, %319 : vector<8x32xf32>
    %321 = arith.truncf %320 : vector<8x32xf32> to vector<8x32xbf16>
    %c48 = arith.constant 48 : index
    %c0_64 = arith.constant 0 : index
    %322 = vector.load %arg4[%c48, %c0_64] : memref<64x32xbf16, #tpu.memory_space<vmem>>, vector<8x32xbf16>
    tpu.vector_store %arg4[%c48, %c0_64], %321 {strides = array<i32>} : memref<64x32xbf16, #tpu.memory_space<vmem>>, vector<8x32xbf16>,
    %323 = vector.extract_strided_slice %3 {offsets = [56, 0], sizes = [8, 128], strides = [1, 1]} : vector<64x128xf32> to vector<8x128xf32>
    %324 = arith.truncf %299 : vector<8x32xf32> to vector<8x32xbf16>
    %cst_65 = arith.constant dense<0.000000e+00> : vector<8x128xf32>
    %325 = tpu.matmul %324, %5, %cst_65 {dimension_numbers = #tpu.dot_dimension_numbers<[1], [0], [0], [1], [0, 0, 1, 1], [], []>} : vector<8x32xbf16>, vector<32x128xbf16>, vector<8x128xf32> -> vector<8x128xf32>
    %326 = arith.addf %323, %325 : vector<8x128xf32>
    %327 = arith.addf %326, %13 : vector<8x128xf32>
    %328 = arith.negf %327 : vector<8x128xf32>
    %329 = math.exp %328 : vector<8x128xf32>
    %cst_66 = arith.constant 1.000000e+00 : f32
    %330 = vector.broadcast %cst_66 : f32 to vector<8x128xf32>
    %331 = arith.addf %330, %329 : vector<8x128xf32>
    %332 = arith.divf %330, %331 : vector<8x128xf32>
    %333 = math.tanh %327 : vector<8x128xf32>
    %334 = vector.extract_strided_slice %332 {offsets = [0, 0], sizes = [8, 32], strides = [1, 1]} : vector<8x128xf32> to vector<8x32xf32>
    %335 = vector.extract_strided_slice %332 {offsets = [0, 32], sizes = [8, 32], strides = [1, 1]} : vector<8x128xf32> to vector<8x32xf32>
    %336 = vector.extract_strided_slice %333 {offsets = [0, 64], sizes = [8, 32], strides = [1, 1]} : vector<8x128xf32> to vector<8x32xf32>
    %337 = vector.extract_strided_slice %332 {offsets = [0, 96], sizes = [8, 32], strides = [1, 1]} : vector<8x128xf32> to vector<8x32xf32>
    %338 = arith.mulf %335, %297 : vector<8x32xf32>
    %339 = arith.mulf %334, %336 : vector<8x32xf32>
    %340 = arith.addf %338, %339 : vector<8x32xf32>
    %341 = math.tanh %340 : vector<8x32xf32>
    %342 = arith.mulf %337, %341 : vector<8x32xf32>
    %343 = arith.truncf %342 : vector<8x32xf32> to vector<8x32xbf16>
    %cst_67 = arith.constant dense<0.000000e+00> : vector<8x128xf32>
    %344 = tpu.matmul %343, %9, %cst_67 {dimension_numbers = #tpu.dot_dimension_numbers<[1], [0], [0], [1], [0, 0, 1, 1], [], []>} : vector<8x32xbf16>, vector<32x128xbf16>, vector<8x128xf32> -> vector<8x128xf32>
    %345 = arith.truncf %320 : vector<8x32xf32> to vector<8x32xbf16>
    %cst_68 = arith.constant dense<0.000000e+00> : vector<8x128xf32>
    %346 = tpu.matmul %345, %7, %cst_68 {dimension_numbers = #tpu.dot_dimension_numbers<[1], [0], [0], [1], [0, 0, 1, 1], [], []>} : vector<8x32xbf16>, vector<32x128xbf16>, vector<8x128xf32> -> vector<8x128xf32>
    %347 = arith.addf %344, %346 : vector<8x128xf32>
    %348 = arith.addf %347, %17 : vector<8x128xf32>
    %349 = arith.negf %348 : vector<8x128xf32>
    %350 = math.exp %349 : vector<8x128xf32>
    %cst_69 = arith.constant 1.000000e+00 : f32
    %351 = vector.broadcast %cst_69 : f32 to vector<8x128xf32>
    %352 = arith.addf %351, %350 : vector<8x128xf32>
    %353 = arith.divf %351, %352 : vector<8x128xf32>
    %354 = math.tanh %348 : vector<8x128xf32>
    %355 = vector.extract_strided_slice %353 {offsets = [0, 0], sizes = [8, 32], strides = [1, 1]} : vector<8x128xf32> to vector<8x32xf32>
    %356 = vector.extract_strided_slice %353 {offsets = [0, 32], sizes = [8, 32], strides = [1, 1]} : vector<8x128xf32> to vector<8x32xf32>
    %357 = vector.extract_strided_slice %354 {offsets = [0, 64], sizes = [8, 32], strides = [1, 1]} : vector<8x128xf32> to vector<8x32xf32>
    %358 = vector.extract_strided_slice %353 {offsets = [0, 96], sizes = [8, 32], strides = [1, 1]} : vector<8x128xf32> to vector<8x32xf32>
    %359 = arith.mulf %356, %318 : vector<8x32xf32>
    %360 = arith.mulf %355, %357 : vector<8x32xf32>
    %361 = arith.addf %359, %360 : vector<8x32xf32>
    %362 = math.tanh %361 : vector<8x32xf32>
    %363 = arith.mulf %358, %362 : vector<8x32xf32>
    %364 = arith.truncf %363 : vector<8x32xf32> to vector<8x32xbf16>
    %c56 = arith.constant 56 : index
    %c0_70 = arith.constant 0 : index
    %365 = vector.load %arg4[%c56, %c0_70] : memref<64x32xbf16, #tpu.memory_space<vmem>>, vector<8x32xbf16>
    tpu.vector_store %arg4[%c56, %c0_70], %364 {strides = array<i32>} : memref<64x32xbf16, #tpu.memory_space<vmem>>, vector<8x32xbf16>,
    return
  }
}

</mosaic_0001>

<llo_original>
// kernel: tpu_custom_call.1
$region0: #{tpu_custom_call.1}
  #allocation0 [shape = 'u32[]', space=smem, size = 0x4, offset = 0x4, fixed_abs, tag = 'smem constant byte address 0x4 - core index']
  #allocation1 [shape = 'u32[144,128]{1,0:T(1,128)}', space=vmem, size = 0x12000, scoped, tag = 'internal scratch']
  %s0 = inlined_call_operand.vmem [shape: bf16[64,32], index: 0, kind: input, shape index: {}]
  %s1 = inlined_call_operand.vmem [shape: bf16[2,32,128], index: 1, kind: input, shape index: {}]
  %s2 = inlined_call_operand.hbm [shape: bf16[2,32,128], index: 2, kind: input, shape index: {}]
  %s3 = inlined_call_operand.vmem [shape: f32[2,1,128], index: 3, kind: input, shape index: {}]
  %s4 = inlined_call_operand.vmem [shape: bf16[64,32], index: 4, kind: output, shape index: {}]
  %s5 = sld [smem:[#allocation0]]
  $region30: #{tpu_custom_call.1} parent=0
    _
  %s7 = ssub.s32 1, %s5
  %s8 = scalar_select 0, %s7, %s5
  $region1: #{tpu_custom_call.1} parent=0
    #allocation2 [shape = 'u8[16384]{0}', space=vmem, size = 0x4000, scoped, tag = 'input window, operand 2, single buffered']
    #allocation3 [shape = 's32[1]{0}', space=sflag, size = 0x4, scoped, tag = 'scoped memory for tpu_custom_call.1']
    %9 = vsyncpa [#allocation3], 0
    // Predicated region
    $region2: #{tpu_custom_call.1} parent=1 // pred_check
      _
    $region3: #{tpu_custom_call.1} parent=1 // pred_check_branch
      %11 = sbr.rel (0) target = $region5
    $region4: #{tpu_custom_call.1} parent=1 // pred_region
      _
    $region5: #{tpu_custom_call.1} parent=1 // pred_fallthru
      _
    // Predicated region
    $region6: #{tpu_custom_call.1} parent=1 // pred_check
      _
    $region7: #{tpu_custom_call.1} parent=1 // pred_check_branch
      %13 = sbr.rel (0) target = $region9
    $region8: #{tpu_custom_call.1} parent=1 // pred_region
      _
    $region9: #{tpu_custom_call.1} parent=1 // pred_fallthru
      _
    // Predicated region
    $region10: #{tpu_custom_call.1} parent=1 // pred_check
      _
    $region11: #{tpu_custom_call.1} parent=1 // pred_check_branch
      %15 = sbr.rel (0) target = $region13
    $region12: #{tpu_custom_call.1} parent=1 // pred_region
      %s17 = ssub.s32 512, 512
      %18 = vsyncadd [#allocation3], %s17
      %s19 = sshll.u32 [#allocation2], 4
      %s20 = int_to_ptr.vmem [resolvable:$true] %s19
      %25 = dma.hbm_to_vmem [thread:$0]  %s2, 512, %s20, [#allocation3], 64, 64, 4
    $region13: #{tpu_custom_call.1} parent=1 // pred_fallthru
      _
    // Predicated region
    $region14: #{tpu_custom_call.1} parent=1 // pred_check
      _
    $region15: #{tpu_custom_call.1} parent=1 // pred_check_branch
      %27 = sbr.rel (0) target = $region17
    $region16: #{tpu_custom_call.1} parent=1 // pred_region
      _
    $region17: #{tpu_custom_call.1} parent=1 // pred_fallthru
      _
    // Predicated region
    $region18: #{tpu_custom_call.1} parent=1 // pred_check
      _
    $region19: #{tpu_custom_call.1} parent=1 // pred_check_branch
      %29 = sbr.rel (0) target = $region21
    $region20: #{tpu_custom_call.1} parent=1 // pred_region
      %30 = dma.done [#allocation3], 512
    $region21: #{tpu_custom_call.1} parent=1 // pred_fallthru
      _
    %v32 = vld [vmem:[%s0] sm:$0xf]
    %v33 = vld [vmem:[%s0 + $0x4] sm:$0xf]
    %v34 = vld [vmem:[%s0 + $0x8] sm:$0xf]
    %v35 = vld [vmem:[%s0 + $0xc] sm:$0xf]
    %v36 = vld [vmem:[%s0 + $0x10] sm:$0xf]
    %v37 = vld [vmem:[%s0 + $0x14] sm:$0xf]
    %v38 = vld [vmem:[%s0 + $0x18] sm:$0xf]
    %v39 = vld [vmem:[%s0 + $0x1c] sm:$0xf]
    %v40 = vld [vmem:[%s1] sm:$0xf]
    %v41 = vld [vmem:[%s1 + $0x4] sm:$0xf]
    %v42 = vld [vmem:[%s1 + $0x8] sm:$0xf]
    %v43 = vld [vmem:[%s1 + $0xc] sm:$0xf]
    %v52 = vunpack.c.l.b16 %v32
    %v53 = vunpack.c.l.b16 %v33
    %v54 = vunpack.c.l.b16 %v34
    %v55 = vunpack.c.l.b16 %v35
    %v56 = vunpack.c.l.b16 %v36
    %v57 = vunpack.c.l.b16 %v37
    %v58 = vunpack.c.l.b16 %v38
    %v59 = vunpack.c.l.b16 %v39
    %v60 = vpack.c.b16 %v53, %v52
    %v61 = vpack.c.b16 %v55, %v54
    %v62 = vpack.c.b16 %v57, %v56
    %v63 = vpack.c.b16 %v59, %v58
    %v68 = vunpack.c.l.b16 %v40
    %v69 = vunpack.c.l.b16 %v41
    %v70 = vunpack.c.l.b16 %v42
    %v71 = vunpack.c.l.b16 %v43
    %v72 = vpack.c.b16 %v69, %v68
    %v73 = vpack.c.b16 %v71, %v70
    %vm76 = vcmask 261120
    %v78 = vsel %vm76, %v60, 0
    %v81 = vsel %vm76, %v61, 0
    %v84 = vsel %vm76, %v62, 0
    %v87 = vsel %vm76, %v63, 0
    %89 = vmatprep.subr.bf16.mxu0 0
    %90 = vmatpush1.bf16.msra.mxu0 0
    %91 = vmatprep.subr.bf16.mxu0 0
    %92 = vmatpush1.bf16.msra.mxu0 0
    %93 = vmatprep.subr.bf16.mxu0 0
    %94 = vmatpush1.bf16.msra.mxu0 0
    %95 = vmatprep.subr.bf16.mxu0 0
    %96 = vmatpush1.bf16.msra.mxu0 0
    %97 = vmatprep.subr.bf16.mxu0 0
    %98 = vmatpush1.bf16.msra.mxu0 0
    %99 = vmatprep.subr.bf16.mxu0 0
    %100 = vmatpush1.bf16.msra.mxu0 0
    %101 = vmatprep.subr.bf16.mxu0 0
    %102 = vmatpush1.bf16.msra.mxu0 %v73
    %103 = vmatprep.subr.bf16.mxu0 0
    %104 = vmatpush1.bf16.msra.mxu0 %v72
    %105 = vmatprep.subr.bf16.mxu0 0
    %106 = vmatpush2.bf16.msra.mxu0 0
    %107 = vmatprep.subr.bf16.mxu0 0
    %108 = vmatpush2.bf16.msra.mxu0 0
    %109 = vmatprep.subr.bf16.mxu0 0
    %110 = vmatpush2.bf16.msra.mxu0 0
    %111 = vmatprep.subr.bf16.mxu0 0
    %112 = vmatpush2.bf16.msra.mxu0 0
    %113 = vmatprep.subr.bf16.mxu0 0
    %114 = vmatpush2.bf16.msra.mxu0 0
    %115 = vmatprep.subr.bf16.mxu0 0
    %116 = vmatpush2.bf16.msra.mxu0 0
    %117 = vmatprep.subr.bf16.mxu0 0
    %118 = vmatpush2.bf16.msra.mxu0 0
    %119 = vmatprep.subr.bf16.mxu0 0
    %120 = vmatpush2.bf16.msra.mxu0 0
    %121 = vmatprep.mubr.bf16.mxu0 0
    %122 = vmatmul.mubr.bf16.gmra.mxu0 %v78
    %v123 = vpop.f32.mrf.mxu0
    %v124 = vadd.f32 0.0, %v123
    %v125 = vpop.f32.mrf.mxu0
    %v126 = vpop.f32.mrf.mxu0
    %v127 = vadd.f32 0.0, %v126
    %v128 = vpop.f32.mrf.mxu0
    %129 = vmatprep.mubr.bf16.mxu0 0
    %130 = vmatmul.mubr.bf16.gmra.mxu0 %v81
    %v131 = vpop.f32.mrf.mxu0
    %v132 = vadd.f32 0.0, %v131
    %v133 = vpop.f32.mrf.mxu0
    %v134 = vpop.f32.mrf.mxu0
    %v135 = vadd.f32 0.0, %v134
    %v136 = vpop.f32.mrf.mxu0
    %137 = vmatprep.mubr.bf16.mxu0 0
    %138 = vmatmul.mubr.bf16.gmra.mxu0 %v84
    %v139 = vpop.f32.mrf.mxu0
    %v140 = vadd.f32 0.0, %v139
    %v141 = vpop.f32.mrf.mxu0
    %v142 = vpop.f32.mrf.mxu0
    %v143 = vadd.f32 0.0, %v142
    %v144 = vpop.f32.mrf.mxu0
    %145 = vmatprep.mubr.bf16.mxu0 0
    %146 = vmatmul.mubr.bf16.gmra.mxu0 %v87
    %v147 = vpop.f32.mrf.mxu0
    %v148 = vadd.f32 0.0, %v147
    %v149 = vpop.f32.mrf.mxu0
    %v150 = vpop.f32.mrf.mxu0
    %v151 = vadd.f32 0.0, %v150
    %v152 = vpop.f32.mrf.mxu0
    %153 = vdwg.mxu0
    %v154 = vld [vmem:[#allocation2] sm:$0xf]
    %v155 = vld [vmem:[#allocation2 + $0x4] sm:$0xf]
    %v156 = vld [vmem:[#allocation2 + $0x8] sm:$0xf]
    %v157 = vld [vmem:[#allocation2 + $0xc] sm:$0xf]
    %s158 = scalar_lea.vmem [#allocation2], 16
    %v159 = vld [vmem:[%s158] sm:$0xf]
    %v160 = vld [vmem:[%s158 + $0x4] sm:$0xf]
    %v161 = vld [vmem:[%s158 + $0x8] sm:$0xf]
    %v162 = vld [vmem:[%s158 + $0xc] sm:$0xf]
    %s163 = scalar_lea.vmem %s1, 16
    %v164 = vld [vmem:[%s163] sm:$0xf]
    %v165 = vld [vmem:[%s163 + $0x4] sm:$0xf]
    %v166 = vld [vmem:[%s163 + $0x8] sm:$0xf]
    %v167 = vld [vmem:[%s163 + $0xc] sm:$0xf]
    %v168 = vld [vmem:[%s3] sm:$0x1]
    %v170 = vlaneseq
    %v171 = vshrl.u32 %v170, 7
    %v172 = vsub.s32 0, %v171
    %v173 = vrot.slane %v168, %v172
    %s175 = scalar_lea.vmem %s3, 1
    %v176 = vld [vmem:[%s175] sm:$0x1]
    %v178 = vlaneseq
    %v179 = vshrl.u32 %v178, 7
    %v180 = vsub.s32 0, %v179
    %v181 = vrot.slane %v176, %v180
    %v187 = vunpack.c.l.b16 %v154
    %v188 = vunpack.c.l.b16 %v155
    %v189 = vunpack.c.l.b16 %v156
    %v190 = vunpack.c.l.b16 %v157
    %v191 = vpack.c.b16 %v188, %v187
    %v192 = vpack.c.b16 %v190, %v189
    %v196 = vsel %vm76, 0, 0
    %198 = vmatprep.subr.bf16.mxu0 0
    %199 = vmatpush1.bf16.msra.mxu0 0
    %200 = vmatprep.subr.bf16.mxu0 0
    %201 = vmatpush1.bf16.msra.mxu0 0
    %202 = vmatprep.subr.bf16.mxu0 0
    %203 = vmatpush1.bf16.msra.mxu0 0
    %204 = vmatprep.subr.bf16.mxu0 0
    %205 = vmatpush1.bf16.msra.mxu0 0
    %206 = vmatprep.subr.bf16.mxu0 0
    %207 = vmatpush1.bf16.msra.mxu0 0
    %208 = vmatprep.subr.bf16.mxu0 0
    %209 = vmatpush1.bf16.msra.mxu0 0
    %210 = vmatprep.subr.bf16.mxu0 0
    %211 = vmatpush1.bf16.msra.mxu0 %v192
    %212 = vmatprep.subr.bf16.mxu0 0
    %213 = vmatpush1.bf16.msra.mxu0 %v191
    %214 = vmatprep.subr.bf16.mxu0 0
    %215 = vmatpush2.bf16.msra.mxu0 0
    %216 = vmatprep.subr.bf16.mxu0 0
    %217 = vmatpush2.bf16.msra.mxu0 0
    %218 = vmatprep.subr.bf16.mxu0 0
    %219 = vmatpush2.bf16.msra.mxu0 0
    %220 = vmatprep.subr.bf16.mxu0 0
    %221 = vmatpush2.bf16.msra.mxu0 0
    %222 = vmatprep.subr.bf16.mxu0 0
    %223 = vmatpush2.bf16.msra.mxu0 0
    %224 = vmatprep.subr.bf16.mxu0 0
    %225 = vmatpush2.bf16.msra.mxu0 0
    %226 = vmatprep.subr.bf16.mxu0 0
    %227 = vmatpush2.bf16.msra.mxu0 0
    %228 = vmatprep.subr.bf16.mxu0 0
    %229 = vmatpush2.bf16.msra.mxu0 0
    %230 = vmatprep.mubr.bf16.mxu0 0
    %231 = vmatmul.mubr.bf16.gmra.mxu0 %v196
    %v232 = vpop.f32.mrf.mxu0
    %v233 = vadd.f32 0.0, %v232
    %v234 = vpop.f32.mrf.mxu0
    %v235 = vpop.f32.mrf.mxu0
    %v236 = vpop.f32.mrf.mxu0
    %237 = vdwg.mxu0
    %v238 = vadd.f32 %v124, %v233
    %v239 = vadd.f32 %v238, %v173
    %v240 = vxor.u32 %v239, 2147483648
    %v241 = vmul.f32 %v240, 1.442695
    %v242 = vpow.pop %v241
    %v243 = vadd.f32 %v242, 1.0
    %v244 = vrcp.pop %v243
    %v245 = vmul.f32 1.0, %v244
    %v246 = vtanh.pop %v239
    %v247 = vmul.f32 %v245, 0.0
    %249 = vrot.lane.b32.xlu0 %v246, 64
    %v250 = vpop.permute.xlu0 %249
    %v252 = vmul.f32 %v245, %v250
    %254 = vrot.lane.b32.xlu0 %v252, 32
    %v255 = vpop.permute.xlu0 %254
    %v257 = vadd.f32 %v247, %v255
    %v258 = vtanh.pop %v257
    %260 = vrot.lane.b32.xlu0 %v258, 64
    %v261 = vpop.permute.xlu0 %260
    %v263 = vmul.f32 %v245, %v261
    %v264 = vpack.c.bf16 %v263, %v263
    %v269 = vunpack.c.l.b16 %v159
    %v270 = vunpack.c.l.b16 %v160
    %v271 = vunpack.c.l.b16 %v161
    %v272 = vunpack.c.l.b16 %v162
    %v273 = vpack.c.b16 %v270, %v269
    %v274 = vpack.c.b16 %v272, %v271
    %277 = vmatprep.subr.bf16.mxu0 0
    %278 = vmatpush1.bf16.msra.mxu0 0
    %279 = vmatprep.subr.bf16.mxu0 0
    %280 = vmatpush1.bf16.msra.mxu0 0
    %281 = vmatprep.subr.bf16.mxu0 0
    %282 = vmatpush1.bf16.msra.mxu0 0
    %283 = vmatprep.subr.bf16.mxu0 0
    %284 = vmatpush1.bf16.msra.mxu0 0
    %285 = vmatprep.subr.bf16.mxu0 0
    %286 = vmatpush1.bf16.msra.mxu0 0
    %287 = vmatprep.subr.bf16.mxu0 0
    %288 = vmatpush1.bf16.msra.mxu0 0
    %289 = vmatprep.subr.bf16.mxu0 0
    %290 = vmatpush1.bf16.msra.mxu0 %v274
    %291 = vmatprep.subr.bf16.mxu0 0
    %292 = vmatpush1.bf16.msra.mxu0 %v273
    %293 = vmatprep.subr.bf16.mxu0 0
    %294 = vmatpush2.bf16.msra.mxu0 0
    %295 = vmatprep.subr.bf16.mxu0 0
    %296 = vmatpush2.bf16.msra.mxu0 0
    %297 = vmatprep.subr.bf16.mxu0 0
    %298 = vmatpush2.bf16.msra.mxu0 0
    %299 = vmatprep.subr.bf16.mxu0 0
    %300 = vmatpush2.bf16.msra.mxu0 0
    %301 = vmatprep.subr.bf16.mxu0 0
    %302 = vmatpush2.bf16.msra.mxu0 0
    %303 = vmatprep.subr.bf16.mxu0 0
    %304 = vmatpush2.bf16.msra.mxu0 0
    %305 = vmatprep.subr.bf16.mxu0 0
    %306 = vmatpush2.bf16.msra.mxu0 0
    %307 = vmatprep.subr.bf16.mxu0 0
    %308 = vmatpush2.bf16.msra.mxu0 0
    %309 = vmatprep.mubr.bf16.mxu0 0
    %310 = vmatmul.mubr.bf16.gmra.mxu0 %v196
    %v311 = vpop.f32.mrf.mxu0
    %v312 = vadd.f32 0.0, %v311
    %v313 = vpop.f32.mrf.mxu0
    %v314 = vpop.f32.mrf.mxu0
    %v315 = vpop.f32.mrf.mxu0
    %316 = vdwg.mxu0
    %318 = vrot.lane.b32.xlu0 %v264, 32
    %v319 = vpop.permute.xlu0 %318
    %v324 = vunpack.c.l.b16 %v164
    %v325 = vunpack.c.l.b16 %v165
    %v326 = vunpack.c.l.b16 %v166
    %v327 = vunpack.c.l.b16 %v167
    %v328 = vpack.c.b16 %v325, %v324
    %v329 = vpack.c.b16 %v327, %v326
    %v333 = vsel %vm76, %v319, 0
    %335 = vmatprep.subr.bf16.mxu0 0
    %336 = vmatpush1.bf16.msra.mxu0 0
    %337 = vmatprep.subr.bf16.mxu0 0
    %338 = vmatpush1.bf16.msra.mxu0 0
    %339 = vmatprep.subr.bf16.mxu0 0
    %340 = vmatpush1.bf16.msra.mxu0 0
    %341 = vmatprep.subr.bf16.mxu0 0
    %342 = vmatpush1.bf16.msra.mxu0 0
    %343 = vmatprep.subr.bf16.mxu0 0
    %344 = vmatpush1.bf16.msra.mxu0 0
    %345 = vmatprep.subr.bf16.mxu0 0
    %346 = vmatpush1.bf16.msra.mxu0 0
    %347 = vmatprep.subr.bf16.mxu0 0
    %348 = vmatpush1.bf16.msra.mxu0 %v329
    %349 = vmatprep.subr.bf16.mxu0 0
    %350 = vmatpush1.bf16.msra.mxu0 %v328
    %351 = vmatprep.subr.bf16.mxu0 0
    %352 = vmatpush2.bf16.msra.mxu0 0
    %353 = vmatprep.subr.bf16.mxu0 0
    %354 = vmatpush2.bf16.msra.mxu0 0
    %355 = vmatprep.subr.bf16.mxu0 0
    %356 = vmatpush2.bf16.msra.mxu0 0
    %357 = vmatprep.subr.bf16.mxu0 0
    %358 = vmatpush2.bf16.msra.mxu0 0
    %359 = vmatprep.subr.bf16.mxu0 0
    %360 = vmatpush2.bf16.msra.mxu0 0
    %361 = vmatprep.subr.bf16.mxu0 0
    %362 = vmatpush2.bf16.msra.mxu0 0
    %363 = vmatprep.subr.bf16.mxu0 0
    %364 = vmatpush2.bf16.msra.mxu0 0
    %365 = vmatprep.subr.bf16.mxu0 0
    %366 = vmatpush2.bf16.msra.mxu0 0
    %367 = vmatprep.mubr.bf16.mxu0 0
    %368 = vmatmul.mubr.bf16.gmra.mxu0 %v333
    %v369 = vpop.f32.mrf.mxu0
    %v370 = vadd.f32 %v312, %v369
    %v371 = vpop.f32.mrf.mxu0
    %v372 = vpop.f32.mrf.mxu0
    %v373 = vpop.f32.mrf.mxu0
    %374 = vdwg.mxu0
    %v375 = vadd.f32 %v370, %v181
    %v376 = vxor.u32 %v375, 2147483648
    %v377 = vmul.f32 %v376, 1.442695
    %v378 = vpow.pop %v377
    %v379 = vadd.f32 %v378, 1.0
    %v380 = vrcp.pop %v379
    %v381 = vmul.f32 1.0, %v380
    %v382 = vtanh.pop %v375
    %v383 = vmul.f32 %v381, 0.0
    %385 = vrot.lane.b32.xlu0 %v382, 64
    %v386 = vpop.permute.xlu0 %385
    %v388 = vmul.f32 %v381, %v386
    %390 = vrot.lane.b32.xlu0 %v388, 32
    %v391 = vpop.permute.xlu0 %390
    %v393 = vadd.f32 %v383, %v391
    %v394 = vtanh.pop %v393
    %396 = vrot.lane.b32.xlu0 %v394, 64
    %v397 = vpop.permute.xlu0 %396
    %v399 = vmul.f32 %v381, %v397
    %v400 = vpack.c.bf16 %v399, %v399
    %v402 = vunpack.c.l.b16 %v400
    %v403 = vpack.c.b16 %v402, %v402
    %404 = vrot.lane.b32.xlu0 %v403, 32
    %v405 = vpop.permute.xlu0 %404
    %vm407 = vcmask 257024
    %408 = vst.msk [vmem:[%s4] sm:$0xf] %vm407, %v405
    %409 = vmatprep.subr.bf16.mxu0 0
    %410 = vmatpush1.bf16.msra.mxu0 0
    %411 = vmatprep.subr.bf16.mxu0 0
    %412 = vmatpush1.bf16.msra.mxu0 0
    %413 = vmatprep.subr.bf16.mxu0 0
    %414 = vmatpush1.bf16.msra.mxu0 0
    %415 = vmatprep.subr.bf16.mxu0 0
    %416 = vmatpush1.bf16.msra.mxu0 0
    %417 = vmatprep.subr.bf16.mxu0 0
    %418 = vmatpush1.bf16.msra.mxu0 0
    %419 = vmatprep.subr.bf16.mxu0 0
    %420 = vmatpush1.bf16.msra.mxu0 0
    %421 = vmatprep.subr.bf16.mxu0 0
    %422 = vmatpush1.bf16.msra.mxu0 %v192
    %423 = vmatprep.subr.bf16.mxu0 0
    %424 = vmatpush1.bf16.msra.mxu0 %v191
    %425 = vmatprep.subr.bf16.mxu0 0
    %426 = vmatpush2.bf16.msra.mxu0 0
    %427 = vmatprep.subr.bf16.mxu0 0
    %428 = vmatpush2.bf16.msra.mxu0 0
    %429 = vmatprep.subr.bf16.mxu0 0
    %430 = vmatpush2.bf16.msra.mxu0 0
    %431 = vmatprep.subr.bf16.mxu0 0
    %432 = vmatpush2.bf16.msra.mxu0 0
    %433 = vmatprep.subr.bf16.mxu0 0
    %434 = vmatpush2.bf16.msra.mxu0 0
    %435 = vmatprep.subr.bf16.mxu0 0
    %436 = vmatpush2.bf16.msra.mxu0 0
    %437 = vmatprep.subr.bf16.mxu0 0
    %438 = vmatpush2.bf16.msra.mxu0 0
    %439 = vmatprep.subr.bf16.mxu0 0
    %440 = vmatpush2.bf16.msra.mxu0 0
    %441 = vmatprep.mubr.bf16.mxu0 0
    %442 = vmatmul.mubr.bf16.gmra.mxu0 %v333
    %v443 = vpop.f32.mrf.mxu0
    %v444 = vadd.f32 0.0, %v443
    %v445 = vpop.f32.mrf.mxu0
    %v446 = vpop.f32.mrf.mxu0
    %v447 = vpop.f32.mrf.mxu0
    %448 = vdwg.mxu0
    %v449 = vadd.f32 %v127, %v444
    %v450 = vadd.f32 %v449, %v173
    %v451 = vxor.u32 %v450, 2147483648
    %v452 = vmul.f32 %v451, 1.442695
    %v453 = vpow.pop %v452
    %v454 = vadd.f32 %v453, 1.0
    %v455 = vrcp.pop %v454
    %v456 = vmul.f32 1.0, %v455
    %v457 = vtanh.pop %v450
    %v458 = vmul.f32 %v456, %v257
    %460 = vrot.lane.b32.xlu0 %v457, 64
    %v461 = vpop.permute.xlu0 %460
    %v463 = vmul.f32 %v456, %v461
    %465 = vrot.lane.b32.xlu0 %v463, 32
    %v466 = vpop.permute.xlu0 %465
    %v468 = vadd.f32 %v458, %v466
    %v469 = vtanh.pop %v468
    %471 = vrot.lane.b32.xlu0 %v469, 64
    %v472 = vpop.permute.xlu0 %471
    %v474 = vmul.f32 %v456, %v472
    %v475 = vpack.c.bf16 %v474, %v474
    %476 = vrot.lane.b32.xlu0 %v400, 32
    %v477 = vpop.permute.xlu0 %476
    %v479 = vsel %vm76, %v477, 0
    %481 = vmatprep.subr.bf16.mxu0 0
    %482 = vmatpush1.bf16.msra.mxu0 0
    %483 = vmatprep.subr.bf16.mxu0 0
    %484 = vmatpush1.bf16.msra.mxu0 0
    %485 = vmatprep.subr.bf16.mxu0 0
    %486 = vmatpush1.bf16.msra.mxu0 0
    %487 = vmatprep.subr.bf16.mxu0 0
    %488 = vmatpush1.bf16.msra.mxu0 0
    %489 = vmatprep.subr.bf16.mxu0 0
    %490 = vmatpush1.bf16.msra.mxu0 0
    %491 = vmatprep.subr.bf16.mxu0 0
    %492 = vmatpush1.bf16.msra.mxu0 0
    %493 = vmatprep.subr.bf16.mxu0 0
    %494 = vmatpush1.bf16.msra.mxu0 %v274
    %495 = vmatprep.subr.bf16.mxu0 0
    %496 = vmatpush1.bf16.msra.mxu0 %v273
    %497 = vmatprep.subr.bf16.mxu0 0
    %498 = vmatpush2.bf16.msra.mxu0 0
    %499 = vmatprep.subr.bf16.mxu0 0
    %500 = vmatpush2.bf16.msra.mxu0 0
    %501 = vmatprep.subr.bf16.mxu0 0
    %502 = vmatpush2.bf16.msra.mxu0 0
    %503 = vmatprep.subr.bf16.mxu0 0
    %504 = vmatpush2.bf16.msra.mxu0 0
    %505 = vmatprep.subr.bf16.mxu0 0
    %506 = vmatpush2.bf16.msra.mxu0 0
    %507 = vmatprep.subr.bf16.mxu0 0
    %508 = vmatpush2.bf16.msra.mxu0 0
    %509 = vmatprep.subr.bf16.mxu0 0
    %510 = vmatpush2.bf16.msra.mxu0 0
    %511 = vmatprep.subr.bf16.mxu0 0
    %512 = vmatpush2.bf16.msra.mxu0 0
    %513 = vmatprep.mubr.bf16.mxu0 0
    %514 = vmatmul.mubr.bf16.gmra.mxu0 %v479
    %v515 = vpop.f32.mrf.mxu0
    %v516 = vadd.f32 0.0, %v515
    %v517 = vpop.f32.mrf.mxu0
    %v518 = vpop.f32.mrf.mxu0
    %v519 = vpop.f32.mrf.mxu0
    %520 = vdwg.mxu0
    %522 = vrot.lane.b32.xlu0 %v475, 32
    %v523 = vpop.permute.xlu0 %522
    %v525 = vsel %vm76, %v523, 0
    %527 = vmatprep.subr.bf16.mxu0 0
    %528 = vmatpush1.bf16.msra.mxu0 0
    %529 = vmatprep.subr.bf16.mxu0 0
    %530 = vmatpush1.bf16.msra.mxu0 0
    %531 = vmatprep.subr.bf16.mxu0 0
    %532 = vmatpush1.bf16.msra.mxu0 0
    %533 = vmatprep.subr.bf16.mxu0 0
    %534 = vmatpush1.bf16.msra.mxu0 0
    %535 = vmatprep.subr.bf16.mxu0 0
    %536 = vmatpush1.bf16.msra.mxu0 0
    %537 = vmatprep.subr.bf16.mxu0 0
    %538 = vmatpush1.bf16.msra.mxu0 0
    %539 = vmatprep.subr.bf16.mxu0 0
    %540 = vmatpush1.bf16.msra.mxu0 %v329
    %541 = vmatprep.subr.bf16.mxu0 0
    %542 = vmatpush1.bf16.msra.mxu0 %v328
    %543 = vmatprep.subr.bf16.mxu0 0
    %544 = vmatpush2.bf16.msra.mxu0 0
    %545 = vmatprep.subr.bf16.mxu0 0
    %546 = vmatpush2.bf16.msra.mxu0 0
    %547 = vmatprep.subr.bf16.mxu0 0
    %548 = vmatpush2.bf16.msra.mxu0 0
    %549 = vmatprep.subr.bf16.mxu0 0
    %550 = vmatpush2.bf16.msra.mxu0 0
    %551 = vmatprep.subr.bf16.mxu0 0
    %552 = vmatpush2.bf16.msra.mxu0 0
    %553 = vmatprep.subr.bf16.mxu0 0
    %554 = vmatpush2.bf16.msra.mxu0 0
    %555 = vmatprep.subr.bf16.mxu0 0
    %556 = vmatpush2.bf16.msra.mxu0 0
    %557 = vmatprep.subr.bf16.mxu0 0
    %558 = vmatpush2.bf16.msra.mxu0 0
    %559 = vmatprep.mubr.bf16.mxu0 0
    %560 = vmatmul.mubr.bf16.gmra.mxu0 %v525
    %v561 = vpop.f32.mrf.mxu0
    %v562 = vadd.f32 %v516, %v561
    %v563 = vpop.f32.mrf.mxu0
    %v564 = vpop.f32.mrf.mxu0
    %v565 = vpop.f32.mrf.mxu0
    %566 = vdwg.mxu0
    %v567 = vadd.f32 %v562, %v181
    %v568 = vxor.u32 %v567, 2147483648
    %v569 = vmul.f32 %v568, 1.442695
    %v570 = vpow.pop %v569
    %v571 = vadd.f32 %v570, 1.0
    %v572 = vrcp.pop %v571
    %v573 = vmul.f32 1.0, %v572
    %v574 = vtanh.pop %v567
    %v575 = vmul.f32 %v573, %v393
    %577 = vrot.lane.b32.xlu0 %v574, 64
    %v578 = vpop.permute.xlu0 %577
    %v580 = vmul.f32 %v573, %v578
    %582 = vrot.lane.b32.xlu0 %v580, 32
    %v583 = vpop.permute.xlu0 %582
    %v585 = vadd.f32 %v575, %v583
    %v586 = vtanh.pop %v585
    %588 = vrot.lane.b32.xlu0 %v586, 64
    %v589 = vpop.permute.xlu0 %588
    %v591 = vmul.f32 %v573, %v589
    %v592 = vpack.c.bf16 %v591, %v591
    %v594 = vunpack.c.l.b16 %v592
    %v595 = vpack.c.b16 %v594, %v594
    %596 = vrot.lane.b32.xlu0 %v595, 32
    %v597 = vpop.permute.xlu0 %596
    %599 = vst.msk [vmem:[%s4 + $0x4] sm:$0xf] %vm407, %v597
    %600 = vmatprep.subr.bf16.mxu0 0
    %601 = vmatpush1.bf16.msra.mxu0 0
    %602 = vmatprep.subr.bf16.mxu0 0
    %603 = vmatpush1.bf16.msra.mxu0 0
    %604 = vmatprep.subr.bf16.mxu0 0
    %605 = vmatpush1.bf16.msra.mxu0 0
    %606 = vmatprep.subr.bf16.mxu0 0
    %607 = vmatpush1.bf16.msra.mxu0 0
    %608 = vmatprep.subr.bf16.mxu0 0
    %609 = vmatpush1.bf16.msra.mxu0 0
    %610 = vmatprep.subr.bf16.mxu0 0
    %611 = vmatpush1.bf16.msra.mxu0 0
    %612 = vmatprep.subr.bf16.mxu0 0
    %613 = vmatpush1.bf16.msra.mxu0 %v192
    %614 = vmatprep.subr.bf16.mxu0 0
    %615 = vmatpush1.bf16.msra.mxu0 %v191
    %616 = vmatprep.subr.bf16.mxu0 0
    %617 = vmatpush2.bf16.msra.mxu0 0
    %618 = vmatprep.subr.bf16.mxu0 0
    %619 = vmatpush2.bf16.msra.mxu0 0
    %620 = vmatprep.subr.bf16.mxu0 0
    %621 = vmatpush2.bf16.msra.mxu0 0
    %622 = vmatprep.subr.bf16.mxu0 0
    %623 = vmatpush2.bf16.msra.mxu0 0
    %624 = vmatprep.subr.bf16.mxu0 0
    %625 = vmatpush2.bf16.msra.mxu0 0
    %626 = vmatprep.subr.bf16.mxu0 0
    %627 = vmatpush2.bf16.msra.mxu0 0
    %628 = vmatprep.subr.bf16.mxu0 0
    %629 = vmatpush2.bf16.msra.mxu0 0
    %630 = vmatprep.subr.bf16.mxu0 0
    %631 = vmatpush2.bf16.msra.mxu0 0
    %632 = vmatprep.mubr.bf16.mxu0 0
    %633 = vmatmul.mubr.bf16.gmra.mxu0 %v525
    %v634 = vpop.f32.mrf.mxu0
    %v635 = vadd.f32 0.0, %v634
    %v636 = vpop.f32.mrf.mxu0
    %v637 = vpop.f32.mrf.mxu0
    %v638 = vpop.f32.mrf.mxu0
    %639 = vdwg.mxu0
    %v640 = vadd.f32 %v132, %v635
    %v641 = vadd.f32 %v640, %v173
    %v642 = vxor.u32 %v641, 2147483648
    %v643 = vmul.f32 %v642, 1.442695
    %v644 = vpow.pop %v643
    %v645 = vadd.f32 %v644, 1.0
    %v646 = vrcp.pop %v645
    %v647 = vmul.f32 1.0, %v646
    %v648 = vtanh.pop %v641
    %v649 = vmul.f32 %v647, %v468
    %651 = vrot.lane.b32.xlu0 %v648, 64
    %v652 = vpop.permute.xlu0 %651
    %v654 = vmul.f32 %v647, %v652
    %656 = vrot.lane.b32.xlu0 %v654, 32
    %v657 = vpop.permute.xlu0 %656
    %v659 = vadd.f32 %v649, %v657
    %v660 = vtanh.pop %v659
    %662 = vrot.lane.b32.xlu0 %v660, 64
    %v663 = vpop.permute.xlu0 %662
    %v665 = vmul.f32 %v647, %v663
    %v666 = vpack.c.bf16 %v665, %v665
    %667 = vrot.lane.b32.xlu0 %v592, 32
    %v668 = vpop.permute.xlu0 %667
    %v670 = vsel %vm76, %v668, 0
    %672 = vmatprep.subr.bf16.mxu0 0
    %673 = vmatpush1.bf16.msra.mxu0 0
    %674 = vmatprep.subr.bf16.mxu0 0
    %675 = vmatpush1.bf16.msra.mxu0 0
    %676 = vmatprep.subr.bf16.mxu0 0
    %677 = vmatpush1.bf16.msra.mxu0 0
    %678 = vmatprep.subr.bf16.mxu0 0
    %679 = vmatpush1.bf16.msra.mxu0 0
    %680 = vmatprep.subr.bf16.mxu0 0
    %681 = vmatpush1.bf16.msra.mxu0 0
    %682 = vmatprep.subr.bf16.mxu0 0
    %683 = vmatpush1.bf16.msra.mxu0 0
    %684 = vmatprep.subr.bf16.mxu0 0
    %685 = vmatpush1.bf16.msra.mxu0 %v274
    %686 = vmatprep.subr.bf16.mxu0 0
    %687 = vmatpush1.bf16.msra.mxu0 %v273
    %688 = vmatprep.subr.bf16.mxu0 0
    %689 = vmatpush2.bf16.msra.mxu0 0
    %690 = vmatprep.subr.bf16.mxu0 0
    %691 = vmatpush2.bf16.msra.mxu0 0
    %692 = vmatprep.subr.bf16.mxu0 0
    %693 = vmatpush2.bf16.msra.mxu0 0
    %694 = vmatprep.subr.bf16.mxu0 0
    %695 = vmatpush2.bf16.msra.mxu0 0
    %696 = vmatprep.subr.bf16.mxu0 0
    %697 = vmatpush2.bf16.msra.mxu0 0
    %698 = vmatprep.subr.bf16.mxu0 0
    %699 = vmatpush2.bf16.msra.mxu0 0
    %700 = vmatprep.subr.bf16.mxu0 0
    %701 = vmatpush2.bf16.msra.mxu0 0
    %702 = vmatprep.subr.bf16.mxu0 0
    %703 = vmatpush2.bf16.msra.mxu0 0
    %704 = vmatprep.mubr.bf16.mxu0 0
    %705 = vmatmul.mubr.bf16.gmra.mxu0 %v670
    %v706 = vpop.f32.mrf.mxu0
    %v707 = vadd.f32 0.0, %v706
    %v708 = vpop.f32.mrf.mxu0
    %v709 = vpop.f32.mrf.mxu0
    %v710 = vpop.f32.mrf.mxu0
    %711 = vdwg.mxu0
    %713 = vrot.lane.b32.xlu0 %v666, 32
    %v714 = vpop.permute.xlu0 %713
    %v716 = vsel %vm76, %v714, 0
    %718 = vmatprep.subr.bf16.mxu0 0
    %719 = vmatpush1.bf16.msra.mxu0 0
    %720 = vmatprep.subr.bf16.mxu0 0
    %721 = vmatpush1.bf16.msra.mxu0 0
    %722 = vmatprep.subr.bf16.mxu0 0
    %723 = vmatpush1.bf16.msra.mxu0 0
    %724 = vmatprep.subr.bf16.mxu0 0
    %725 = vmatpush1.bf16.msra.mxu0 0
    %726 = vmatprep.subr.bf16.mxu0 0
    %727 = vmatpush1.bf16.msra.mxu0 0
    %728 = vmatprep.subr.bf16.mxu0 0
    %729 = vmatpush1.bf16.msra.mxu0 0
    %730 = vmatprep.subr.bf16.mxu0 0
    %731 = vmatpush1.bf16.msra.mxu0 %v329
    %732 = vmatprep.subr.bf16.mxu0 0
    %733 = vmatpush1.bf16.msra.mxu0 %v328
    %734 = vmatprep.subr.bf16.mxu0 0
    %735 = vmatpush2.bf16.msra.mxu0 0
    %736 = vmatprep.subr.bf16.mxu0 0
    %737 = vmatpush2.bf16.msra.mxu0 0
    %738 = vmatprep.subr.bf16.mxu0 0
    %739 = vmatpush2.bf16.msra.mxu0 0
    %740 = vmatprep.subr.bf16.mxu0 0
    %741 = vmatpush2.bf16.msra.mxu0 0
    %742 = vmatprep.subr.bf16.mxu0 0
    %743 = vmatpush2.bf16.msra.mxu0 0
    %744 = vmatprep.subr.bf16.mxu0 0
    %745 = vmatpush2.bf16.msra.mxu0 0
    %746 = vmatprep.subr.bf16.mxu0 0
    %747 = vmatpush2.bf16.msra.mxu0 0
    %748 = vmatprep.subr.bf16.mxu0 0
    %749 = vmatpush2.bf16.msra.mxu0 0
    %750 = vmatprep.mubr.bf16.mxu0 0
    %751 = vmatmul.mubr.bf16.gmra.mxu0 %v716
    %v752 = vpop.f32.mrf.mxu0
    %v753 = vadd.f32 %v707, %v752
    %v754 = vpop.f32.mrf.mxu0
    %v755 = vpop.f32.mrf.mxu0
    %v756 = vpop.f32.mrf.mxu0
    %757 = vdwg.mxu0
    %v758 = vadd.f32 %v753, %v181
    %v759 = vxor.u32 %v758, 2147483648
    %v760 = vmul.f32 %v759, 1.442695
    %v761 = vpow.pop %v760
    %v762 = vadd.f32 %v761, 1.0
    %v763 = vrcp.pop %v762
    %v764 = vmul.f32 1.0, %v763
    %v765 = vtanh.pop %v758
    %v766 = vmul.f32 %v764, %v585
    %768 = vrot.lane.b32.xlu0 %v765, 64
    %v769 = vpop.permute.xlu0 %768
    %v771 = vmul.f32 %v764, %v769
    %773 = vrot.lane.b32.xlu0 %v771, 32
    %v774 = vpop.permute.xlu0 %773
    %v776 = vadd.f32 %v766, %v774
    %v777 = vtanh.pop %v776
    %779 = vrot.lane.b32.xlu0 %v777, 64
    %v780 = vpop.permute.xlu0 %779
    %v782 = vmul.f32 %v764, %v780
    %v783 = vpack.c.bf16 %v782, %v782
    %v785 = vunpack.c.l.b16 %v783
    %v786 = vpack.c.b16 %v785, %v785
    %787 = vrot.lane.b32.xlu0 %v786, 32
    %v788 = vpop.permute.xlu0 %787
    %790 = vst.msk [vmem:[%s4 + $0x8] sm:$0xf] %vm407, %v788
    %791 = vmatprep.subr.bf16.mxu0 0
    %792 = vmatpush1.bf16.msra.mxu0 0
    %793 = vmatprep.subr.bf16.mxu0 0
    %794 = vmatpush1.bf16.msra.mxu0 0
    %795 = vmatprep.subr.bf16.mxu0 0
    %796 = vmatpush1.bf16.msra.mxu0 0
    %797 = vmatprep.subr.bf16.mxu0 0
    %798 = vmatpush1.bf16.msra.mxu0 0
    %799 = vmatprep.subr.bf16.mxu0 0
    %800 = vmatpush1.bf16.msra.mxu0 0
    %801 = vmatprep.subr.bf16.mxu0 0
    %802 = vmatpush1.bf16.msra.mxu0 0
    %803 = vmatprep.subr.bf16.mxu0 0
    %804 = vmatpush1.bf16.msra.mxu0 %v192
    %805 = vmatprep.subr.bf16.mxu0 0
    %806 = vmatpush1.bf16.msra.mxu0 %v191
    %807 = vmatprep.subr.bf16.mxu0 0
    %808 = vmatpush2.bf16.msra.mxu0 0
    %809 = vmatprep.subr.bf16.mxu0 0
    %810 = vmatpush2.bf16.msra.mxu0 0
    %811 = vmatprep.subr.bf16.mxu0 0
    %812 = vmatpush2.bf16.msra.mxu0 0
    %813 = vmatprep.subr.bf16.mxu0 0
    %814 = vmatpush2.bf16.msra.mxu0 0
    %815 = vmatprep.subr.bf16.mxu0 0
    %816 = vmatpush2.bf16.msra.mxu0 0
    %817 = vmatprep.subr.bf16.mxu0 0
    %818 = vmatpush2.bf16.msra.mxu0 0
    %819 = vmatprep.subr.bf16.mxu0 0
    %820 = vmatpush2.bf16.msra.mxu0 0
    %821 = vmatprep.subr.bf16.mxu0 0
    %822 = vmatpush2.bf16.msra.mxu0 0
    %823 = vmatprep.mubr.bf16.mxu0 0
    %824 = vmatmul.mubr.bf16.gmra.mxu0 %v716
    %v825 = vpop.f32.mrf.mxu0
    %v826 = vadd.f32 0.0, %v825
    %v827 = vpop.f32.mrf.mxu0
    %v828 = vpop.f32.mrf.mxu0
    %v829 = vpop.f32.mrf.mxu0
    %830 = vdwg.mxu0
    %v831 = vadd.f32 %v135, %v826
    %v832 = vadd.f32 %v831, %v173
    %v833 = vxor.u32 %v832, 2147483648
    %v834 = vmul.f32 %v833, 1.442695
    %v835 = vpow.pop %v834
    %v836 = vadd.f32 %v835, 1.0
    %v837 = vrcp.pop %v836
    %v838 = vmul.f32 1.0, %v837
    %v839 = vtanh.pop %v832
    %v840 = vmul.f32 %v838, %v659
    %842 = vrot.lane.b32.xlu0 %v839, 64
    %v843 = vpop.permute.xlu0 %842
    %v845 = vmul.f32 %v838, %v843
    %847 = vrot.lane.b32.xlu0 %v845, 32
    %v848 = vpop.permute.xlu0 %847
    %v850 = vadd.f32 %v840, %v848
    %v851 = vtanh.pop %v850
    %853 = vrot.lane.b32.xlu0 %v851, 64
    %v854 = vpop.permute.xlu0 %853
    %v856 = vmul.f32 %v838, %v854
    %v857 = vpack.c.bf16 %v856, %v856
    %858 = vrot.lane.b32.xlu0 %v783, 32
    %v859 = vpop.permute.xlu0 %858
    %v861 = vsel %vm76, %v859, 0
    %863 = vmatprep.subr.bf16.mxu0 0
    %864 = vmatpush1.bf16.msra.mxu0 0
    %865 = vmatprep.subr.bf16.mxu0 0
    %866 = vmatpush1.bf16.msra.mxu0 0
    %867 = vmatprep.subr.bf16.mxu0 0
    %868 = vmatpush1.bf16.msra.mxu0 0
    %869 = vmatprep.subr.bf16.mxu0 0
    %870 = vmatpush1.bf16.msra.mxu0 0
    %871 = vmatprep.subr.bf16.mxu0 0
    %872 = vmatpush1.bf16.msra.mxu0 0
    %873 = vmatprep.subr.bf16.mxu0 0
    %874 = vmatpush1.bf16.msra.mxu0 0
    %875 = vmatprep.subr.bf16.mxu0 0
    %876 = vmatpush1.bf16.msra.mxu0 %v274
    %877 = vmatprep.subr.bf16.mxu0 0
    %878 = vmatpush1.bf16.msra.mxu0 %v273
    %879 = vmatprep.subr.bf16.mxu0 0
    %880 = vmatpush2.bf16.msra.mxu0 0
    %881 = vmatprep.subr.bf16.mxu0 0
    %882 = vmatpush2.bf16.msra.mxu0 0
    %883 = vmatprep.subr.bf16.mxu0 0
    %884 = vmatpush2.bf16.msra.mxu0 0
    %885 = vmatprep.subr.bf16.mxu0 0
    %886 = vmatpush2.bf16.msra.mxu0 0
    %887 = vmatprep.subr.bf16.mxu0 0
    %888 = vmatpush2.bf16.msra.mxu0 0
    %889 = vmatprep.subr.bf16.mxu0 0
    %890 = vmatpush2.bf16.msra.mxu0 0
    %891 = vmatprep.subr.bf16.mxu0 0
    %892 = vmatpush2.bf16.msra.mxu0 0
    %893 = vmatprep.subr.bf16.mxu0 0
    %894 = vmatpush2.bf16.msra.mxu0 0
    %895 = vmatprep.mubr.bf16.mxu0 0
    %896 = vmatmul.mubr.bf16.gmra.mxu0 %v861
    %v897 = vpop.f32.mrf.mxu0
    %v898 = vadd.f32 0.0, %v897
    %v899 = vpop.f32.mrf.mxu0
    %v900 = vpop.f32.mrf.mxu0
    %v901 = vpop.f32.mrf.mxu0
    %902 = vdwg.mxu0
    %904 = vrot.lane.b32.xlu0 %v857, 32
    %v905 = vpop.permute.xlu0 %904
    %v907 = vsel %vm76, %v905, 0
    %909 = vmatprep.subr.bf16.mxu0 0
    %910 = vmatpush1.bf16.msra.mxu0 0
    %911 = vmatprep.subr.bf16.mxu0 0
    %912 = vmatpush1.bf16.msra.mxu0 0
    %913 = vmatprep.subr.bf16.mxu0 0
    %914 = vmatpush1.bf16.msra.mxu0 0
    %915 = vmatprep.subr.bf16.mxu0 0
    %916 = vmatpush1.bf16.msra.mxu0 0
    %917 = vmatprep.subr.bf16.mxu0 0
    %918 = vmatpush1.bf16.msra.mxu0 0
    %919 = vmatprep.subr.bf16.mxu0 0
    %920 = vmatpush1.bf16.msra.mxu0 0
    %921 = vmatprep.subr.bf16.mxu0 0
    %922 = vmatpush1.bf16.msra.mxu0 %v329
    %923 = vmatprep.subr.bf16.mxu0 0
    %924 = vmatpush1.bf16.msra.mxu0 %v328
    %925 = vmatprep.subr.bf16.mxu0 0
    %926 = vmatpush2.bf16.msra.mxu0 0
    %927 = vmatprep.subr.bf16.mxu0 0
    %928 = vmatpush2.bf16.msra.mxu0 0
    %929 = vmatprep.subr.bf16.mxu0 0
    %930 = vmatpush2.bf16.msra.mxu0 0
    %931 = vmatprep.subr.bf16.mxu0 0
    %932 = vmatpush2.bf16.msra.mxu0 0
    %933 = vmatprep.subr.bf16.mxu0 0
    %934 = vmatpush2.bf16.msra.mxu0 0
    %935 = vmatprep.subr.bf16.mxu0 0
    %936 = vmatpush2.bf16.msra.mxu0 0
    %937 = vmatprep.subr.bf16.mxu0 0
    %938 = vmatpush2.bf16.msra.mxu0 0
    %939 = vmatprep.subr.bf16.mxu0 0
    %940 = vmatpush2.bf16.msra.mxu0 0
    %941 = vmatprep.mubr.bf16.mxu0 0
    %942 = vmatmul.mubr.bf16.gmra.mxu0 %v907
    %v943 = vpop.f32.mrf.mxu0
    %v944 = vadd.f32 %v898, %v943
    %v945 = vpop.f32.mrf.mxu0
    %v946 = vpop.f32.mrf.mxu0
    %v947 = vpop.f32.mrf.mxu0
    %948 = vdwg.mxu0
    %v949 = vadd.f32 %v944, %v181
    %v950 = vxor.u32 %v949, 2147483648
    %v951 = vmul.f32 %v950, 1.442695
    %v952 = vpow.pop %v951
    %v953 = vadd.f32 %v952, 1.0
    %v954 = vrcp.pop %v953
    %v955 = vmul.f32 1.0, %v954
    %v956 = vtanh.pop %v949
    %v957 = vmul.f32 %v955, %v776
    %959 = vrot.lane.b32.xlu0 %v956, 64
    %v960 = vpop.permute.xlu0 %959
    %v962 = vmul.f32 %v955, %v960
    %964 = vrot.lane.b32.xlu0 %v962, 32
    %v965 = vpop.permute.xlu0 %964
    %v967 = vadd.f32 %v957, %v965
    %v968 = vtanh.pop %v967
    %970 = vrot.lane.b32.xlu0 %v968, 64
    %v971 = vpop.permute.xlu0 %970
    %v973 = vmul.f32 %v955, %v971
    %v974 = vpack.c.bf16 %v973, %v973
    %v976 = vunpack.c.l.b16 %v974
    %v977 = vpack.c.b16 %v976, %v976
    %978 = vrot.lane.b32.xlu0 %v977, 32
    %v979 = vpop.permute.xlu0 %978
    %981 = vst.msk [vmem:[%s4 + $0xc] sm:$0xf] %vm407, %v979
    %982 = vmatprep.subr.bf16.mxu0 0
    %983 = vmatpush1.bf16.msra.mxu0 0
    %984 = vmatprep.subr.bf16.mxu0 0
    %985 = vmatpush1.bf16.msra.mxu0 0
    %986 = vmatprep.subr.bf16.mxu0 0
    %987 = vmatpush1.bf16.msra.mxu0 0
    %988 = vmatprep.subr.bf16.mxu0 0
    %989 = vmatpush1.bf16.msra.mxu0 0
    %990 = vmatprep.subr.bf16.mxu0 0
    %991 = vmatpush1.bf16.msra.mxu0 0
    %992 = vmatprep.subr.bf16.mxu0 0
    %993 = vmatpush1.bf16.msra.mxu0 0
    %994 = vmatprep.subr.bf16.mxu0 0
    %995 = vmatpush1.bf16.msra.mxu0 %v192
    %996 = vmatprep.subr.bf16.mxu0 0
    %997 = vmatpush1.bf16.msra.mxu0 %v191
    %998 = vmatprep.subr.bf16.mxu0 0
    %999 = vmatpush2.bf16.msra.mxu0 0
    %1000 = vmatprep.subr.bf16.mxu0 0
    %1001 = vmatpush2.bf16.msra.mxu0 0
    %1002 = vmatprep.subr.bf16.mxu0 0
    %1003 = vmatpush2.bf16.msra.mxu0 0
    %1004 = vmatprep.subr.bf16.mxu0 0
    %1005 = vmatpush2.bf16.msra.mxu0 0
    %1006 = vmatprep.subr.bf16.mxu0 0
    %1007 = vmatpush2.bf16.msra.mxu0 0
    %1008 = vmatprep.subr.bf16.mxu0 0
    %1009 = vmatpush2.bf16.msra.mxu0 0
    %1010 = vmatprep.subr.bf16.mxu0 0
    %1011 = vmatpush2.bf16.msra.mxu0 0
    %1012 = vmatprep.subr.bf16.mxu0 0
    %1013 = vmatpush2.bf16.msra.mxu0 0
    %1014 = vmatprep.mubr.bf16.mxu0 0
    %1015 = vmatmul.mubr.bf16.gmra.mxu0 %v907
    %v1016 = vpop.f32.mrf.mxu0
    %v1017 = vadd.f32 0.0, %v1016
    %v1018 = vpop.f32.mrf.mxu0
    %v1019 = vpop.f32.mrf.mxu0
    %v1020 = vpop.f32.mrf.mxu0
    %1021 = vdwg.mxu0
    %v1022 = vadd.f32 %v140, %v1017
    %v1023 = vadd.f32 %v1022, %v173
    %v1024 = vxor.u32 %v1023, 2147483648
    %v1025 = vmul.f32 %v1024, 1.442695
    %v1026 = vpow.pop %v1025
    %v1027 = vadd.f32 %v1026, 1.0
    %v1028 = vrcp.pop %v1027
    %v1029 = vmul.f32 1.0, %v1028
    %v1030 = vtanh.pop %v1023
    %v1031 = vmul.f32 %v1029, %v850
    %1033 = vrot.lane.b32.xlu0 %v1030, 64
    %v1034 = vpop.permute.xlu0 %1033
    %v1036 = vmul.f32 %v1029, %v1034
    %1038 = vrot.lane.b32.xlu0 %v1036, 32
    %v1039 = vpop.permute.xlu0 %1038
    %v1041 = vadd.f32 %v1031, %v1039
    %v1042 = vtanh.pop %v1041
    %1044 = vrot.lane.b32.xlu0 %v1042, 64
    %v1045 = vpop.permute.xlu0 %1044
    %v1047 = vmul.f32 %v1029, %v1045
    %v1048 = vpack.c.bf16 %v1047, %v1047
    %1049 = vrot.lane.b32.xlu0 %v974, 32
    %v1050 = vpop.permute.xlu0 %1049
    %v1052 = vsel %vm76, %v1050, 0
    %1054 = vmatprep.subr.bf16.mxu0 0
    %1055 = vmatpush1.bf16.msra.mxu0 0
    %1056 = vmatprep.subr.bf16.mxu0 0
    %1057 = vmatpush1.bf16.msra.mxu0 0
    %1058 = vmatprep.subr.bf16.mxu0 0
    %1059 = vmatpush1.bf16.msra.mxu0 0
    %1060 = vmatprep.subr.bf16.mxu0 0
    %1061 = vmatpush1.bf16.msra.mxu0 0
    %1062 = vmatprep.subr.bf16.mxu0 0
    %1063 = vmatpush1.bf16.msra.mxu0 0
    %1064 = vmatprep.subr.bf16.mxu0 0
    %1065 = vmatpush1.bf16.msra.mxu0 0
    %1066 = vmatprep.subr.bf16.mxu0 0
    %1067 = vmatpush1.bf16.msra.mxu0 %v274
    %1068 = vmatprep.subr.bf16.mxu0 0
    %1069 = vmatpush1.bf16.msra.mxu0 %v273
    %1070 = vmatprep.subr.bf16.mxu0 0
    %1071 = vmatpush2.bf16.msra.mxu0 0
    %1072 = vmatprep.subr.bf16.mxu0 0
    %1073 = vmatpush2.bf16.msra.mxu0 0
    %1074 = vmatprep.subr.bf16.mxu0 0
    %1075 = vmatpush2.bf16.msra.mxu0 0
    %1076 = vmatprep.subr.bf16.mxu0 0
    %1077 = vmatpush2.bf16.msra.mxu0 0
    %1078 = vmatprep.subr.bf16.mxu0 0
    %1079 = vmatpush2.bf16.msra.mxu0 0
    %1080 = vmatprep.subr.bf16.mxu0 0
    %1081 = vmatpush2.bf16.msra.mxu0 0
    %1082 = vmatprep.subr.bf16.mxu0 0
    %1083 = vmatpush2.bf16.msra.mxu0 0
    %1084 = vmatprep.subr.bf16.mxu0 0
    %1085 = vmatpush2.bf16.msra.mxu0 0
    %1086 = vmatprep.mubr.bf16.mxu0 0
    %1087 = vmatmul.mubr.bf16.gmra.mxu0 %v1052
    %v1088 = vpop.f32.mrf.mxu0
    %v1089 = vadd.f32 0.0, %v1088
    %v1090 = vpop.f32.mrf.mxu0
    %v1091 = vpop.f32.mrf.mxu0
    %v1092 = vpop.f32.mrf.mxu0
    %1093 = vdwg.mxu0
    %1095 = vrot.lane.b32.xlu0 %v1048, 32
    %v1096 = vpop.permute.xlu0 %1095
    %v1098 = vsel %vm76, %v1096, 0
    %1100 = vmatprep.subr.bf16.mxu0 0
    %1101 = vmatpush1.bf16.msra.mxu0 0
    %1102 = vmatprep.subr.bf16.mxu0 0
    %1103 = vmatpush1.bf16.msra.mxu0 0
    %1104 = vmatprep.subr.bf16.mxu0 0
    %1105 = vmatpush1.bf16.msra.mxu0 0
    %1106 = vmatprep.subr.bf16.mxu0 0
    %1107 = vmatpush1.bf16.msra.mxu0 0
    %1108 = vmatprep.subr.bf16.mxu0 0
    %1109 = vmatpush1.bf16.msra.mxu0 0
    %1110 = vmatprep.subr.bf16.mxu0 0
    %1111 = vmatpush1.bf16.msra.mxu0 0
    %1112 = vmatprep.subr.bf16.mxu0 0
    %1113 = vmatpush1.bf16.msra.mxu0 %v329
    %1114 = vmatprep.subr.bf16.mxu0 0
    %1115 = vmatpush1.bf16.msra.mxu0 %v328
    %1116 = vmatprep.subr.bf16.mxu0 0
    %1117 = vmatpush2.bf16.msra.mxu0 0
    %1118 = vmatprep.subr.bf16.mxu0 0
    %1119 = vmatpush2.bf16.msra.mxu0 0
    %1120 = vmatprep.subr.bf16.mxu0 0
    %1121 = vmatpush2.bf16.msra.mxu0 0
    %1122 = vmatprep.subr.bf16.mxu0 0
    %1123 = vmatpush2.bf16.msra.mxu0 0
    %1124 = vmatprep.subr.bf16.mxu0 0
    %1125 = vmatpush2.bf16.msra.mxu0 0
    %1126 = vmatprep.subr.bf16.mxu0 0
    %1127 = vmatpush2.bf16.msra.mxu0 0
    %1128 = vmatprep.subr.bf16.mxu0 0
    %1129 = vmatpush2.bf16.msra.mxu0 0
    %1130 = vmatprep.subr.bf16.mxu0 0
    %1131 = vmatpush2.bf16.msra.mxu0 0
    %1132 = vmatprep.mubr.bf16.mxu0 0
    %1133 = vmatmul.mubr.bf16.gmra.mxu0 %v1098
    %v1134 = vpop.f32.mrf.mxu0
    %v1135 = vadd.f32 %v1089, %v1134
    %v1136 = vpop.f32.mrf.mxu0
    %v1137 = vpop.f32.mrf.mxu0
    %v1138 = vpop.f32.mrf.mxu0
    %1139 = vdwg.mxu0
    %v1140 = vadd.f32 %v1135, %v181
    %v1141 = vxor.u32 %v1140, 2147483648
    %v1142 = vmul.f32 %v1141, 1.442695
    %v1143 = vpow.pop %v1142
    %v1144 = vadd.f32 %v1143, 1.0
    %v1145 = vrcp.pop %v1144
    %v1146 = vmul.f32 1.0, %v1145
    %v1147 = vtanh.pop %v1140
    %v1148 = vmul.f32 %v1146, %v967
    %1150 = vrot.lane.b32.xlu0 %v1147, 64
    %v1151 = vpop.permute.xlu0 %1150
    %v1153 = vmul.f32 %v1146, %v1151
    %1155 = vrot.lane.b32.xlu0 %v1153, 32
    %v1156 = vpop.permute.xlu0 %1155
    %v1158 = vadd.f32 %v1148, %v1156
    %v1159 = vtanh.pop %v1158
    %1161 = vrot.lane.b32.xlu0 %v1159, 64
    %v1162 = vpop.permute.xlu0 %1161
    %v1164 = vmul.f32 %v1146, %v1162
    %v1165 = vpack.c.bf16 %v1164, %v1164
    %v1167 = vunpack.c.l.b16 %v1165
    %v1168 = vpack.c.b16 %v1167, %v1167
    %1169 = vrot.lane.b32.xlu0 %v1168, 32
    %v1170 = vpop.permute.xlu0 %1169
    %1172 = vst.msk [vmem:[%s4 + $0x10] sm:$0xf] %vm407, %v1170
    %1173 = vmatprep.subr.bf16.mxu0 0
    %1174 = vmatpush1.bf16.msra.mxu0 0
    %1175 = vmatprep.subr.bf16.mxu0 0
    %1176 = vmatpush1.bf16.msra.mxu0 0
    %1177 = vmatprep.subr.bf16.mxu0 0
    %1178 = vmatpush1.bf16.msra.mxu0 0
    %1179 = vmatprep.subr.bf16.mxu0 0
    %1180 = vmatpush1.bf16.msra.mxu0 0
    %1181 = vmatprep.subr.bf16.mxu0 0
    %1182 = vmatpush1.bf16.msra.mxu0 0
    %1183 = vmatprep.subr.bf16.mxu0 0
    %1184 = vmatpush1.bf16.msra.mxu0 0
    %1185 = vmatprep.subr.bf16.mxu0 0
    %1186 = vmatpush1.bf16.msra.mxu0 %v192
    %1187 = vmatprep.subr.bf16.mxu0 0
    %1188 = vmatpush1.bf16.msra.mxu0 %v191
    %1189 = vmatprep.subr.bf16.mxu0 0
    %1190 = vmatpush2.bf16.msra.mxu0 0
    %1191 = vmatprep.subr.bf16.mxu0 0
    %1192 = vmatpush2.bf16.msra.mxu0 0
    %1193 = vmatprep.subr.bf16.mxu0 0
    %1194 = vmatpush2.bf16.msra.mxu0 0
    %1195 = vmatprep.subr.bf16.mxu0 0
    %1196 = vmatpush2.bf16.msra.mxu0 0
    %1197 = vmatprep.subr.bf16.mxu0 0
    %1198 = vmatpush2.bf16.msra.mxu0 0
    %1199 = vmatprep.subr.bf16.mxu0 0
    %1200 = vmatpush2.bf16.msra.mxu0 0
    %1201 = vmatprep.subr.bf16.mxu0 0
    %1202 = vmatpush2.bf16.msra.mxu0 0
    %1203 = vmatprep.subr.bf16.mxu0 0
    %1204 = vmatpush2.bf16.msra.mxu0 0
    %1205 = vmatprep.mubr.bf16.mxu0 0
    %1206 = vmatmul.mubr.bf16.gmra.mxu0 %v1098
    %v1207 = vpop.f32.mrf.mxu0
    %v1208 = vadd.f32 0.0, %v1207
    %v1209 = vpop.f32.mrf.mxu0
    %v1210 = vpop.f32.mrf.mxu0
    %v1211 = vpop.f32.mrf.mxu0
    %1212 = vdwg.mxu0
    %v1213 = vadd.f32 %v143, %v1208
    %v1214 = vadd.f32 %v1213, %v173
    %v1215 = vxor.u32 %v1214, 2147483648
    %v1216 = vmul.f32 %v1215, 1.442695
    %v1217 = vpow.pop %v1216
    %v1218 = vadd.f32 %v1217, 1.0
    %v1219 = vrcp.pop %v1218
    %v1220 = vmul.f32 1.0, %v1219
    %v1221 = vtanh.pop %v1214
    %v1222 = vmul.f32 %v1220, %v1041
    %1224 = vrot.lane.b32.xlu0 %v1221, 64
    %v1225 = vpop.permute.xlu0 %1224
    %v1227 = vmul.f32 %v1220, %v1225
    %1229 = vrot.lane.b32.xlu0 %v1227, 32
    %v1230 = vpop.permute.xlu0 %1229
    %v1232 = vadd.f32 %v1222, %v1230
    %v1233 = vtanh.pop %v1232
    %1235 = vrot.lane.b32.xlu0 %v1233, 64
    %v1236 = vpop.permute.xlu0 %1235
    %v1238 = vmul.f32 %v1220, %v1236
    %v1239 = vpack.c.bf16 %v1238, %v1238
    %1240 = vrot.lane.b32.xlu0 %v1165, 32
    %v1241 = vpop.permute.xlu0 %1240
    %v1243 = vsel %vm76, %v1241, 0
    %1245 = vmatprep.subr.bf16.mxu0 0
    %1246 = vmatpush1.bf16.msra.mxu0 0
    %1247 = vmatprep.subr.bf16.mxu0 0
    %1248 = vmatpush1.bf16.msra.mxu0 0
    %1249 = vmatprep.subr.bf16.mxu0 0
    %1250 = vmatpush1.bf16.msra.mxu0 0
    %1251 = vmatprep.subr.bf16.mxu0 0
    %1252 = vmatpush1.bf16.msra.mxu0 0
    %1253 = vmatprep.subr.bf16.mxu0 0
    %1254 = vmatpush1.bf16.msra.mxu0 0
    %1255 = vmatprep.subr.bf16.mxu0 0
    %1256 = vmatpush1.bf16.msra.mxu0 0
    %1257 = vmatprep.subr.bf16.mxu0 0
    %1258 = vmatpush1.bf16.msra.mxu0 %v274
    %1259 = vmatprep.subr.bf16.mxu0 0
    %1260 = vmatpush1.bf16.msra.mxu0 %v273
    %1261 = vmatprep.subr.bf16.mxu0 0
    %1262 = vmatpush2.bf16.msra.mxu0 0
    %1263 = vmatprep.subr.bf16.mxu0 0
    %1264 = vmatpush2.bf16.msra.mxu0 0
    %1265 = vmatprep.subr.bf16.mxu0 0
    %1266 = vmatpush2.bf16.msra.mxu0 0
    %1267 = vmatprep.subr.bf16.mxu0 0
    %1268 = vmatpush2.bf16.msra.mxu0 0
    %1269 = vmatprep.subr.bf16.mxu0 0
    %1270 = vmatpush2.bf16.msra.mxu0 0
    %1271 = vmatprep.subr.bf16.mxu0 0
    %1272 = vmatpush2.bf16.msra.mxu0 0
    %1273 = vmatprep.subr.bf16.mxu0 0
    %1274 = vmatpush2.bf16.msra.mxu0 0
    %1275 = vmatprep.subr.bf16.mxu0 0
    %1276 = vmatpush2.bf16.msra.mxu0 0
    %1277 = vmatprep.mubr.bf16.mxu0 0
    %1278 = vmatmul.mubr.bf16.gmra.mxu0 %v1243
    %v1279 = vpop.f32.mrf.mxu0
    %v1280 = vadd.f32 0.0, %v1279
    %v1281 = vpop.f32.mrf.mxu0
    %v1282 = vpop.f32.mrf.mxu0
    %v1283 = vpop.f32.mrf.mxu0
    %1284 = vdwg.mxu0
    %1286 = vrot.lane.b32.xlu0 %v1239, 32
    %v1287 = vpop.permute.xlu0 %1286
    %v1289 = vsel %vm76, %v1287, 0
    %1291 = vmatprep.subr.bf16.mxu0 0
    %1292 = vmatpush1.bf16.msra.mxu0 0
    %1293 = vmatprep.subr.bf16.mxu0 0
    %1294 = vmatpush1.bf16.msra.mxu0 0
    %1295 = vmatprep.subr.bf16.mxu0 0
    %1296 = vmatpush1.bf16.msra.mxu0 0
    %1297 = vmatprep.subr.bf16.mxu0 0
    %1298 = vmatpush1.bf16.msra.mxu0 0
    %1299 = vmatprep.subr.bf16.mxu0 0
    %1300 = vmatpush1.bf16.msra.mxu0 0
    %1301 = vmatprep.subr.bf16.mxu0 0
    %1302 = vmatpush1.bf16.msra.mxu0 0
    %1303 = vmatprep.subr.bf16.mxu0 0
    %1304 = vmatpush1.bf16.msra.mxu0 %v329
    %1305 = vmatprep.subr.bf16.mxu0 0
    %1306 = vmatpush1.bf16.msra.mxu0 %v328
    %1307 = vmatprep.subr.bf16.mxu0 0
    %1308 = vmatpush2.bf16.msra.mxu0 0
    %1309 = vmatprep.subr.bf16.mxu0 0
    %1310 = vmatpush2.bf16.msra.mxu0 0
    %1311 = vmatprep.subr.bf16.mxu0 0
    %1312 = vmatpush2.bf16.msra.mxu0 0
    %1313 = vmatprep.subr.bf16.mxu0 0
    %1314 = vmatpush2.bf16.msra.mxu0 0
    %1315 = vmatprep.subr.bf16.mxu0 0
    %1316 = vmatpush2.bf16.msra.mxu0 0
    %1317 = vmatprep.subr.bf16.mxu0 0
    %1318 = vmatpush2.bf16.msra.mxu0 0
    %1319 = vmatprep.subr.bf16.mxu0 0
    %1320 = vmatpush2.bf16.msra.mxu0 0
    %1321 = vmatprep.subr.bf16.mxu0 0
    %1322 = vmatpush2.bf16.msra.mxu0 0
    %1323 = vmatprep.mubr.bf16.mxu0 0
    %1324 = vmatmul.mubr.bf16.gmra.mxu0 %v1289
    %v1325 = vpop.f32.mrf.mxu0
    %v1326 = vadd.f32 %v1280, %v1325
    %v1327 = vpop.f32.mrf.mxu0
    %v1328 = vpop.f32.mrf.mxu0
    %v1329 = vpop.f32.mrf.mxu0
    %1330 = vdwg.mxu0
    %v1331 = vadd.f32 %v1326, %v181
    %v1332 = vxor.u32 %v1331, 2147483648
    %v1333 = vmul.f32 %v1332, 1.442695
    %v1334 = vpow.pop %v1333
    %v1335 = vadd.f32 %v1334, 1.0
    %v1336 = vrcp.pop %v1335
    %v1337 = vmul.f32 1.0, %v1336
    %v1338 = vtanh.pop %v1331
    %v1339 = vmul.f32 %v1337, %v1158
    %1341 = vrot.lane.b32.xlu0 %v1338, 64
    %v1342 = vpop.permute.xlu0 %1341
    %v1344 = vmul.f32 %v1337, %v1342
    %1346 = vrot.lane.b32.xlu0 %v1344, 32
    %v1347 = vpop.permute.xlu0 %1346
    %v1349 = vadd.f32 %v1339, %v1347
    %v1350 = vtanh.pop %v1349
    %1352 = vrot.lane.b32.xlu0 %v1350, 64
    %v1353 = vpop.permute.xlu0 %1352
    %v1355 = vmul.f32 %v1337, %v1353
    %v1356 = vpack.c.bf16 %v1355, %v1355
    %v1358 = vunpack.c.l.b16 %v1356
    %v1359 = vpack.c.b16 %v1358, %v1358
    %1360 = vrot.lane.b32.xlu0 %v1359, 32
    %v1361 = vpop.permute.xlu0 %1360
    %1363 = vst.msk [vmem:[%s4 + $0x14] sm:$0xf] %vm407, %v1361
    %1364 = vmatprep.subr.bf16.mxu0 0
    %1365 = vmatpush1.bf16.msra.mxu0 0
    %1366 = vmatprep.subr.bf16.mxu0 0
    %1367 = vmatpush1.bf16.msra.mxu0 0
    %1368 = vmatprep.subr.bf16.mxu0 0
    %1369 = vmatpush1.bf16.msra.mxu0 0
    %1370 = vmatprep.subr.bf16.mxu0 0
    %1371 = vmatpush1.bf16.msra.mxu0 0
    %1372 = vmatprep.subr.bf16.mxu0 0
    %1373 = vmatpush1.bf16.msra.mxu0 0
    %1374 = vmatprep.subr.bf16.mxu0 0
    %1375 = vmatpush1.bf16.msra.mxu0 0
    %1376 = vmatprep.subr.bf16.mxu0 0
    %1377 = vmatpush1.bf16.msra.mxu0 %v192
    %1378 = vmatprep.subr.bf16.mxu0 0
    %1379 = vmatpush1.bf16.msra.mxu0 %v191
    %1380 = vmatprep.subr.bf16.mxu0 0
    %1381 = vmatpush2.bf16.msra.mxu0 0
    %1382 = vmatprep.subr.bf16.mxu0 0
    %1383 = vmatpush2.bf16.msra.mxu0 0
    %1384 = vmatprep.subr.bf16.mxu0 0
    %1385 = vmatpush2.bf16.msra.mxu0 0
    %1386 = vmatprep.subr.bf16.mxu0 0
    %1387 = vmatpush2.bf16.msra.mxu0 0
    %1388 = vmatprep.subr.bf16.mxu0 0
    %1389 = vmatpush2.bf16.msra.mxu0 0
    %1390 = vmatprep.subr.bf16.mxu0 0
    %1391 = vmatpush2.bf16.msra.mxu0 0
    %1392 = vmatprep.subr.bf16.mxu0 0
    %1393 = vmatpush2.bf16.msra.mxu0 0
    %1394 = vmatprep.subr.bf16.mxu0 0
    %1395 = vmatpush2.bf16.msra.mxu0 0
    %1396 = vmatprep.mubr.bf16.mxu0 0
    %1397 = vmatmul.mubr.bf16.gmra.mxu0 %v1289
    %v1398 = vpop.f32.mrf.mxu0
    %v1399 = vadd.f32 0.0, %v1398
    %v1400 = vpop.f32.mrf.mxu0
    %v1401 = vpop.f32.mrf.mxu0
    %v1402 = vpop.f32.mrf.mxu0
    %1403 = vdwg.mxu0
    %v1404 = vadd.f32 %v148, %v1399
    %v1405 = vadd.f32 %v1404, %v173
    %v1406 = vxor.u32 %v1405, 2147483648
    %v1407 = vmul.f32 %v1406, 1.442695
    %v1408 = vpow.pop %v1407
    %v1409 = vadd.f32 %v1408, 1.0
    %v1410 = vrcp.pop %v1409
    %v1411 = vmul.f32 1.0, %v1410
    %v1412 = vtanh.pop %v1405
    %v1413 = vmul.f32 %v1411, %v1232
    %1415 = vrot.lane.b32.xlu0 %v1412, 64
    %v1416 = vpop.permute.xlu0 %1415
    %v1418 = vmul.f32 %v1411, %v1416
    %1420 = vrot.lane.b32.xlu0 %v1418, 32
    %v1421 = vpop.permute.xlu0 %1420
    %v1423 = vadd.f32 %v1413, %v1421
    %v1424 = vtanh.pop %v1423
    %1426 = vrot.lane.b32.xlu0 %v1424, 64
    %v1427 = vpop.permute.xlu0 %1426
    %v1429 = vmul.f32 %v1411, %v1427
    %v1430 = vpack.c.bf16 %v1429, %v1429
    %1431 = vrot.lane.b32.xlu0 %v1356, 32
    %v1432 = vpop.permute.xlu0 %1431
    %v1434 = vsel %vm76, %v1432, 0
    %1436 = vmatprep.subr.bf16.mxu0 0
    %1437 = vmatpush1.bf16.msra.mxu0 0
    %1438 = vmatprep.subr.bf16.mxu0 0
    %1439 = vmatpush1.bf16.msra.mxu0 0
    %1440 = vmatprep.subr.bf16.mxu0 0
    %1441 = vmatpush1.bf16.msra.mxu0 0
    %1442 = vmatprep.subr.bf16.mxu0 0
    %1443 = vmatpush1.bf16.msra.mxu0 0
    %1444 = vmatprep.subr.bf16.mxu0 0
    %1445 = vmatpush1.bf16.msra.mxu0 0
    %1446 = vmatprep.subr.bf16.mxu0 0
    %1447 = vmatpush1.bf16.msra.mxu0 0
    %1448 = vmatprep.subr.bf16.mxu0 0
    %1449 = vmatpush1.bf16.msra.mxu0 %v274
    %1450 = vmatprep.subr.bf16.mxu0 0
    %1451 = vmatpush1.bf16.msra.mxu0 %v273
    %1452 = vmatprep.subr.bf16.mxu0 0
    %1453 = vmatpush2.bf16.msra.mxu0 0
    %1454 = vmatprep.subr.bf16.mxu0 0
    %1455 = vmatpush2.bf16.msra.mxu0 0
    %1456 = vmatprep.subr.bf16.mxu0 0
    %1457 = vmatpush2.bf16.msra.mxu0 0
    %1458 = vmatprep.subr.bf16.mxu0 0
    %1459 = vmatpush2.bf16.msra.mxu0 0
    %1460 = vmatprep.subr.bf16.mxu0 0
    %1461 = vmatpush2.bf16.msra.mxu0 0
    %1462 = vmatprep.subr.bf16.mxu0 0
    %1463 = vmatpush2.bf16.msra.mxu0 0
    %1464 = vmatprep.subr.bf16.mxu0 0
    %1465 = vmatpush2.bf16.msra.mxu0 0
    %1466 = vmatprep.subr.bf16.mxu0 0
    %1467 = vmatpush2.bf16.msra.mxu0 0
    %1468 = vmatprep.mubr.bf16.mxu0 0
    %1469 = vmatmul.mubr.bf16.gmra.mxu0 %v1434
    %v1470 = vpop.f32.mrf.mxu0
    %v1471 = vadd.f32 0.0, %v1470
    %v1472 = vpop.f32.mrf.mxu0
    %v1473 = vpop.f32.mrf.mxu0
    %v1474 = vpop.f32.mrf.mxu0
    %1475 = vdwg.mxu0
    %1477 = vrot.lane.b32.xlu0 %v1430, 32
    %v1478 = vpop.permute.xlu0 %1477
    %v1480 = vsel %vm76, %v1478, 0
    %1482 = vmatprep.subr.bf16.mxu0 0
    %1483 = vmatpush1.bf16.msra.mxu0 0
    %1484 = vmatprep.subr.bf16.mxu0 0
    %1485 = vmatpush1.bf16.msra.mxu0 0
    %1486 = vmatprep.subr.bf16.mxu0 0
    %1487 = vmatpush1.bf16.msra.mxu0 0
    %1488 = vmatprep.subr.bf16.mxu0 0
    %1489 = vmatpush1.bf16.msra.mxu0 0
    %1490 = vmatprep.subr.bf16.mxu0 0
    %1491 = vmatpush1.bf16.msra.mxu0 0
    %1492 = vmatprep.subr.bf16.mxu0 0
    %1493 = vmatpush1.bf16.msra.mxu0 0
    %1494 = vmatprep.subr.bf16.mxu0 0
    %1495 = vmatpush1.bf16.msra.mxu0 %v329
    %1496 = vmatprep.subr.bf16.mxu0 0
    %1497 = vmatpush1.bf16.msra.mxu0 %v328
    %1498 = vmatprep.subr.bf16.mxu0 0
    %1499 = vmatpush2.bf16.msra.mxu0 0
    %1500 = vmatprep.subr.bf16.mxu0 0
    %1501 = vmatpush2.bf16.msra.mxu0 0
    %1502 = vmatprep.subr.bf16.mxu0 0
    %1503 = vmatpush2.bf16.msra.mxu0 0
    %1504 = vmatprep.subr.bf16.mxu0 0
    %1505 = vmatpush2.bf16.msra.mxu0 0
    %1506 = vmatprep.subr.bf16.mxu0 0
    %1507 = vmatpush2.bf16.msra.mxu0 0
    %1508 = vmatprep.subr.bf16.mxu0 0
    %1509 = vmatpush2.bf16.msra.mxu0 0
    %1510 = vmatprep.subr.bf16.mxu0 0
    %1511 = vmatpush2.bf16.msra.mxu0 0
    %1512 = vmatprep.subr.bf16.mxu0 0
    %1513 = vmatpush2.bf16.msra.mxu0 0
    %1514 = vmatprep.mubr.bf16.mxu0 0
    %1515 = vmatmul.mubr.bf16.gmra.mxu0 %v1480
    %v1516 = vpop.f32.mrf.mxu0
    %v1517 = vadd.f32 %v1471, %v1516
    %v1518 = vpop.f32.mrf.mxu0
    %v1519 = vpop.f32.mrf.mxu0
    %v1520 = vpop.f32.mrf.mxu0
    %1521 = vdwg.mxu0
    %v1522 = vadd.f32 %v1517, %v181
    %v1523 = vxor.u32 %v1522, 2147483648
    %v1524 = vmul.f32 %v1523, 1.442695
    %v1525 = vpow.pop %v1524
    %v1526 = vadd.f32 %v1525, 1.0
    %v1527 = vrcp.pop %v1526
    %v1528 = vmul.f32 1.0, %v1527
    %v1529 = vtanh.pop %v1522
    %v1530 = vmul.f32 %v1528, %v1349
    %1532 = vrot.lane.b32.xlu0 %v1529, 64
    %v1533 = vpop.permute.xlu0 %1532
    %v1535 = vmul.f32 %v1528, %v1533
    %1537 = vrot.lane.b32.xlu0 %v1535, 32
    %v1538 = vpop.permute.xlu0 %1537
    %v1540 = vadd.f32 %v1530, %v1538
    %v1541 = vtanh.pop %v1540
    %1543 = vrot.lane.b32.xlu0 %v1541, 64
    %v1544 = vpop.permute.xlu0 %1543
    %v1546 = vmul.f32 %v1528, %v1544
    %v1547 = vpack.c.bf16 %v1546, %v1546
    %v1549 = vunpack.c.l.b16 %v1547
    %v1550 = vpack.c.b16 %v1549, %v1549
    %1551 = vrot.lane.b32.xlu0 %v1550, 32
    %v1552 = vpop.permute.xlu0 %1551
    %1554 = vst.msk [vmem:[%s4 + $0x18] sm:$0xf] %vm407, %v1552
    %1555 = vmatprep.subr.bf16.mxu0 0
    %1556 = vmatpush1.bf16.msra.mxu0 0
    %1557 = vmatprep.subr.bf16.mxu0 0
    %1558 = vmatpush1.bf16.msra.mxu0 0
    %1559 = vmatprep.subr.bf16.mxu0 0
    %1560 = vmatpush1.bf16.msra.mxu0 0
    %1561 = vmatprep.subr.bf16.mxu0 0
    %1562 = vmatpush1.bf16.msra.mxu0 0
    %1563 = vmatprep.subr.bf16.mxu0 0
    %1564 = vmatpush1.bf16.msra.mxu0 0
    %1565 = vmatprep.subr.bf16.mxu0 0
    %1566 = vmatpush1.bf16.msra.mxu0 0
    %1567 = vmatprep.subr.bf16.mxu0 0
    %1568 = vmatpush1.bf16.msra.mxu0 %v192
    %1569 = vmatprep.subr.bf16.mxu0 0
    %1570 = vmatpush1.bf16.msra.mxu0 %v191
    %1571 = vmatprep.subr.bf16.mxu0 0
    %1572 = vmatpush2.bf16.msra.mxu0 0
    %1573 = vmatprep.subr.bf16.mxu0 0
    %1574 = vmatpush2.bf16.msra.mxu0 0
    %1575 = vmatprep.subr.bf16.mxu0 0
    %1576 = vmatpush2.bf16.msra.mxu0 0
    %1577 = vmatprep.subr.bf16.mxu0 0
    %1578 = vmatpush2.bf16.msra.mxu0 0
    %1579 = vmatprep.subr.bf16.mxu0 0
    %1580 = vmatpush2.bf16.msra.mxu0 0
    %1581 = vmatprep.subr.bf16.mxu0 0
    %1582 = vmatpush2.bf16.msra.mxu0 0
    %1583 = vmatprep.subr.bf16.mxu0 0
    %1584 = vmatpush2.bf16.msra.mxu0 0
    %1585 = vmatprep.subr.bf16.mxu0 0
    %1586 = vmatpush2.bf16.msra.mxu0 0
    %1587 = vmatprep.mubr.bf16.mxu0 0
    %1588 = vmatmul.mubr.bf16.gmra.mxu0 %v1480
    %v1589 = vpop.f32.mrf.mxu0
    %v1590 = vadd.f32 0.0, %v1589
    %v1591 = vpop.f32.mrf.mxu0
    %v1592 = vpop.f32.mrf.mxu0
    %v1593 = vpop.f32.mrf.mxu0
    %1594 = vdwg.mxu0
    %v1595 = vadd.f32 %v151, %v1590
    %v1596 = vadd.f32 %v1595, %v173
    %v1597 = vxor.u32 %v1596, 2147483648
    %v1598 = vmul.f32 %v1597, 1.442695
    %v1599 = vpow.pop %v1598
    %v1600 = vadd.f32 %v1599, 1.0
    %v1601 = vrcp.pop %v1600
    %v1602 = vmul.f32 1.0, %v1601
    %v1603 = vtanh.pop %v1596
    %v1604 = vmul.f32 %v1602, %v1423
    %1606 = vrot.lane.b32.xlu0 %v1603, 64
    %v1607 = vpop.permute.xlu0 %1606
    %v1609 = vmul.f32 %v1602, %v1607
    %1611 = vrot.lane.b32.xlu0 %v1609, 32
    %v1612 = vpop.permute.xlu0 %1611
    %v1614 = vadd.f32 %v1604, %v1612
    %v1615 = vtanh.pop %v1614
    %1617 = vrot.lane.b32.xlu0 %v1615, 64
    %v1618 = vpop.permute.xlu0 %1617
    %v1620 = vmul.f32 %v1602, %v1618
    %v1621 = vpack.c.bf16 %v1620, %v1620
    %1622 = vrot.lane.b32.xlu0 %v1547, 32
    %v1623 = vpop.permute.xlu0 %1622
    %v1625 = vsel %vm76, %v1623, 0
    %1627 = vmatprep.subr.bf16.mxu0 0
    %1628 = vmatpush1.bf16.msra.mxu0 0
    %1629 = vmatprep.subr.bf16.mxu0 0
    %1630 = vmatpush1.bf16.msra.mxu0 0
    %1631 = vmatprep.subr.bf16.mxu0 0
    %1632 = vmatpush1.bf16.msra.mxu0 0
    %1633 = vmatprep.subr.bf16.mxu0 0
    %1634 = vmatpush1.bf16.msra.mxu0 0
    %1635 = vmatprep.subr.bf16.mxu0 0
    %1636 = vmatpush1.bf16.msra.mxu0 0
    %1637 = vmatprep.subr.bf16.mxu0 0
    %1638 = vmatpush1.bf16.msra.mxu0 0
    %1639 = vmatprep.subr.bf16.mxu0 0
    %1640 = vmatpush1.bf16.msra.mxu0 %v274
    %1641 = vmatprep.subr.bf16.mxu0 0
    %1642 = vmatpush1.bf16.msra.mxu0 %v273
    %1643 = vmatprep.subr.bf16.mxu0 0
    %1644 = vmatpush2.bf16.msra.mxu0 0
    %1645 = vmatprep.subr.bf16.mxu0 0
    %1646 = vmatpush2.bf16.msra.mxu0 0
    %1647 = vmatprep.subr.bf16.mxu0 0
    %1648 = vmatpush2.bf16.msra.mxu0 0
    %1649 = vmatprep.subr.bf16.mxu0 0
    %1650 = vmatpush2.bf16.msra.mxu0 0
    %1651 = vmatprep.subr.bf16.mxu0 0
    %1652 = vmatpush2.bf16.msra.mxu0 0
    %1653 = vmatprep.subr.bf16.mxu0 0
    %1654 = vmatpush2.bf16.msra.mxu0 0
    %1655 = vmatprep.subr.bf16.mxu0 0
    %1656 = vmatpush2.bf16.msra.mxu0 0
    %1657 = vmatprep.subr.bf16.mxu0 0
    %1658 = vmatpush2.bf16.msra.mxu0 0
    %1659 = vmatprep.mubr.bf16.mxu0 0
    %1660 = vmatmul.mubr.bf16.gmra.mxu0 %v1625
    %v1661 = vpop.f32.mrf.mxu0
    %v1662 = vadd.f32 0.0, %v1661
    %v1663 = vpop.f32.mrf.mxu0
    %v1664 = vpop.f32.mrf.mxu0
    %v1665 = vpop.f32.mrf.mxu0
    %1666 = vdwg.mxu0
    %1668 = vrot.lane.b32.xlu0 %v1621, 32
    %v1669 = vpop.permute.xlu0 %1668
    %v1671 = vsel %vm76, %v1669, 0
    %1673 = vmatprep.subr.bf16.mxu0 0
    %1674 = vmatpush1.bf16.msra.mxu0 0
    %1675 = vmatprep.subr.bf16.mxu0 0
    %1676 = vmatpush1.bf16.msra.mxu0 0
    %1677 = vmatprep.subr.bf16.mxu0 0
    %1678 = vmatpush1.bf16.msra.mxu0 0
    %1679 = vmatprep.subr.bf16.mxu0 0
    %1680 = vmatpush1.bf16.msra.mxu0 0
    %1681 = vmatprep.subr.bf16.mxu0 0
    %1682 = vmatpush1.bf16.msra.mxu0 0
    %1683 = vmatprep.subr.bf16.mxu0 0
    %1684 = vmatpush1.bf16.msra.mxu0 0
    %1685 = vmatprep.subr.bf16.mxu0 0
    %1686 = vmatpush1.bf16.msra.mxu0 %v329
    %1687 = vmatprep.subr.bf16.mxu0 0
    %1688 = vmatpush1.bf16.msra.mxu0 %v328
    %1689 = vmatprep.subr.bf16.mxu0 0
    %1690 = vmatpush2.bf16.msra.mxu0 0
    %1691 = vmatprep.subr.bf16.mxu0 0
    %1692 = vmatpush2.bf16.msra.mxu0 0
    %1693 = vmatprep.subr.bf16.mxu0 0
    %1694 = vmatpush2.bf16.msra.mxu0 0
    %1695 = vmatprep.subr.bf16.mxu0 0
    %1696 = vmatpush2.bf16.msra.mxu0 0
    %1697 = vmatprep.subr.bf16.mxu0 0
    %1698 = vmatpush2.bf16.msra.mxu0 0
    %1699 = vmatprep.subr.bf16.mxu0 0
    %1700 = vmatpush2.bf16.msra.mxu0 0
    %1701 = vmatprep.subr.bf16.mxu0 0
    %1702 = vmatpush2.bf16.msra.mxu0 0
    %1703 = vmatprep.subr.bf16.mxu0 0
    %1704 = vmatpush2.bf16.msra.mxu0 0
    %1705 = vmatprep.mubr.bf16.mxu0 0
    %1706 = vmatmul.mubr.bf16.gmra.mxu0 %v1671
    %v1707 = vpop.f32.mrf.mxu0
    %v1708 = vadd.f32 %v1662, %v1707
    %v1709 = vpop.f32.mrf.mxu0
    %v1710 = vpop.f32.mrf.mxu0
    %v1711 = vpop.f32.mrf.mxu0
    %1712 = vdwg.mxu0
    %v1713 = vadd.f32 %v1708, %v181
    %v1714 = vxor.u32 %v1713, 2147483648
    %v1715 = vmul.f32 %v1714, 1.442695
    %v1716 = vpow.pop %v1715
    %v1717 = vadd.f32 %v1716, 1.0
    %v1718 = vrcp.pop %v1717
    %v1719 = vmul.f32 1.0, %v1718
    %v1720 = vtanh.pop %v1713
    %v1721 = vmul.f32 %v1719, %v1540
    %1723 = vrot.lane.b32.xlu0 %v1720, 64
    %v1724 = vpop.permute.xlu0 %1723
    %v1726 = vmul.f32 %v1719, %v1724
    %1728 = vrot.lane.b32.xlu0 %v1726, 32
    %v1729 = vpop.permute.xlu0 %1728
    %v1731 = vadd.f32 %v1721, %v1729
    %v1732 = vtanh.pop %v1731
    %1734 = vrot.lane.b32.xlu0 %v1732, 64
    %v1735 = vpop.permute.xlu0 %1734
    %v1737 = vmul.f32 %v1719, %v1735
    %v1738 = vpack.c.bf16 %v1737, %v1737
    %v1740 = vunpack.c.l.b16 %v1738
    %v1741 = vpack.c.b16 %v1740, %v1740
    %1742 = vrot.lane.b32.xlu0 %v1741, 32
    %v1743 = vpop.permute.xlu0 %1742
    %1745 = vst.msk [vmem:[%s4 + $0x1c] sm:$0xf] %vm407, %v1743
    // Predicated region
    $region22: #{tpu_custom_call.1} parent=1 // pred_check
      _
    $region23: #{tpu_custom_call.1} parent=1 // pred_check_branch
      %1747 = sbr.rel (0) target = $region25
    $region24: #{tpu_custom_call.1} parent=1 // pred_region
      _
    $region25: #{tpu_custom_call.1} parent=1 // pred_fallthru
      _
    // Predicated region
    $region26: #{tpu_custom_call.1} parent=1 // pred_check
      _
    $region27: #{tpu_custom_call.1} parent=1 // pred_check_branch
      %1749 = sbr.rel (0) target = $region29
    $region28: #{tpu_custom_call.1} parent=1 // pred_region
      _
    $region29: #{tpu_custom_call.1} parent=1 // pred_fallthru
      _
    %1750 = vsyncpa [#allocation3], 1

</llo_original>
